<compile_context>
chip_gen: v6e
topology: v6e:2x2x1
jax: 0.10.0
libtpu: 0.0.40
codegen_flags: <defaults>
</compile_context>

<pallas_src>
import functools

import jax
import jax.numpy as jnp
from jax.experimental import pallas as pl
from jax.experimental.pallas import tpu as pltpu


LEAKY_SLOPE = 0.01  # PyTorch nn.LeakyReLU default negative_slope


def _texthead_kernel(fwd_ref, bwd_ref, tgt_ref, w1f_ref, w1b_ref, w2_ref,
                     logits_ref, loss_ref,
                     h_sc, m_sc, l_sc, p_sc):
    j = pl.program_id(1)
    nv = pl.num_programs(1)
    tv = logits_ref.shape[1]

    # ---- layer 1 (once per row tile): h = LeakyReLU(fwd @ W1f + bwd @ W1b)
    @pl.when(j == 0)
    def _():
        h = jnp.dot(fwd_ref[...].astype(w1f_ref.dtype), w1f_ref[...],
                    preferred_element_type=jnp.float32)
        h = h + jnp.dot(bwd_ref[...].astype(w1b_ref.dtype), w1b_ref[...],
                        preferred_element_type=jnp.float32)
        h = jnp.where(h > 0, h, LEAKY_SLOPE * h)
        h_sc[...] = h.astype(h_sc.dtype)
        m_sc[...] = jnp.full_like(m_sc, -jnp.inf)
        l_sc[...] = jnp.zeros_like(l_sc)
        p_sc[...] = jnp.zeros_like(p_sc)

    # ---- layer 2 for this vocab tile: logits_j = h @ W2[:, j*tv:(j+1)*tv]
    logits = jnp.dot(h_sc[...], w2_ref[...], preferred_element_type=jnp.float32)
    logits_ref[...] = logits.astype(logits_ref.dtype)

    # ---- online logsumexp across vocab tiles
    m_prev = m_sc[...]
    m_new = jnp.maximum(m_prev, jnp.max(logits, axis=-1, keepdims=True))
    alpha = jnp.exp(m_prev - m_new)
    l_sc[...] = alpha * l_sc[...] + jnp.sum(jnp.exp(logits - m_new),
                                            axis=-1, keepdims=True)
    m_sc[...] = m_new

    # ---- picked target logit (only the tile containing the target contributes)
    # TODO(synk): out-of-range / ignore_index targets are not checked or masked
    # (torch.nn.CrossEntropyLoss would error / ignore); callers must pass valid
    # targets in [0, V).
    tgt_col = tgt_ref[0].T                                     # (tm, 1) int32
    col = jax.lax.broadcasted_iota(jnp.int32, logits.shape, 1) + j * tv
    p_sc[...] += jnp.sum(jnp.where(col == tgt_col, logits, 0.0),
                         axis=-1, keepdims=True)

    # ---- epilogue: per-row cross entropy, stored lane-dense
    @pl.when(j == nv - 1)
    def _():
        loss_row = (jnp.log(l_sc[...]) + m_sc[...]) - p_sc[...]   # (tm, 1) f32
        tm = loss_row.shape[0]
        loss_ref[...] = loss_row.T.reshape(1, 1, tm).astype(loss_ref.dtype)


def _round_up(x, m):
    return ((x + m - 1) // m) * m


def _choose_row_tile(M, tm_max):
    # Keep >= 2 grid steps whenever M allows (v7x megacore) while keeping tm a
    # multiple of 8 (sublane granularity), capped at tm_max.
    return int(min(tm_max, max(8, _round_up((M + 1) // 2, 8))))


def _choose_vocab_tile(V, tv_max):
    if V <= tv_max:
        return int(V)
    t = (tv_max // 128) * 128
    while t >= 128:
        if V % t == 0:
            return int(t)
        t -= 128
    return int(V)   # fallback: whole vocab resident


def _probe_copy_kernel(x_ref, o_ref):
    o_ref[...] = x_ref[...]


@functools.lru_cache(maxsize=None)
def _single_buffer_weights_supported():
    """True iff BlockSpec(pipeline_mode=pl.Buffered(1)) lowers on this jax/TPU."""
    if not hasattr(pl, "Buffered"):
        return False
    try:
        spec = pl.BlockSpec((8, 128), lambda i: (0, 0),
                            pipeline_mode=pl.Buffered(1))
        probe = pl.pallas_call(
            _probe_copy_kernel,
            grid=(2,),
            in_specs=[spec],
            out_specs=pl.BlockSpec((8, 128), lambda i: (0, 0)),
            out_shape=jax.ShapeDtypeStruct((8, 128), jnp.float32))
        jax.jit(probe).lower(jnp.zeros((8, 128), jnp.float32)).compile()
        return True
    except Exception:
        return False


def _const_weight_spec(block_shape, index_map):
    # Constant-index weight blocks never change across the grid; single-buffer
    # them (halves their VMEM) when supported.
    if _single_buffer_weights_supported():
        return pl.BlockSpec(block_shape, index_map, pipeline_mode=pl.Buffered(1))
    return pl.BlockSpec(block_shape, index_map)


@functools.partial(
    jax.jit,
    static_argnames=("tm_max", "tv_max", "matmul_dtype", "logits_dtype"))
def texthead_forward(forward_embedding, backward_embedding, w1, w2, targets,
                     *, tm_max=512, tv_max=2048,
                     matmul_dtype=jnp.bfloat16, logits_dtype=jnp.bfloat16):
    """Fused TextHead forward.

    Returns (logits (B,T,V), loss_before_mean (B*T,), loss scalar), matching
    TextHead.forward(fwd, bwd, targets, return_info=True) semantics.
    Pass logits_dtype=jnp.float32 for full-precision logits output.
    """
    B, T, n_f = forward_embedding.shape
    _, _, n_b = backward_embedding.shape
    d_in, hidden = w1.shape
    assert d_in == n_f + n_b
    _, V = w2.shape

    M = B * T
    tm = _choose_row_tile(M, tm_max)
    G = pl.cdiv(M, tm)
    Mpad = G * tm
    tv = _choose_vocab_tile(V, tv_max)
    NV = V // tv

    fwd = forward_embedding.reshape(M, n_f)
    bwd = backward_embedding.reshape(M, n_b)
    tgt = targets.reshape(M).astype(jnp.int32)
    if Mpad != M:
        fwd = jnp.pad(fwd, ((0, Mpad - M), (0, 0)))
        bwd = jnp.pad(bwd, ((0, Mpad - M), (0, 0)))
        tgt = jnp.pad(tgt, (0, Mpad - M))
    tgt = tgt.reshape(G, 1, tm)                      # lane-dense target layout

    w1f = w1[:n_f].astype(matmul_dtype)              # W1 split: no wrapper concat
    w1b = w1[n_f:].astype(matmul_dtype)
    w2c = w2.astype(matmul_dtype)

    x_itm = jnp.dtype(fwd.dtype).itemsize
    w_itm = jnp.dtype(matmul_dtype).itemsize
    o_itm = jnp.dtype(logits_dtype).itemsize

    # Rough VMEM footprint (pipeline buffers + scratch), 2x headroom, clamped
    # below v7x's 64 MiB physical VMEM.
    vmem_est = (2 * tm * (n_f + n_b) * x_itm          # activation blocks (x2 buf)
                + 4 * tm * 4                          # tgt + loss blocks
                + (n_f + n_b) * hidden * w_itm        # w1 halves
                + 2 * hidden * tv * w_itm             # w2 tile (x2 buf)
                + 2 * tm * tv * o_itm                 # logits tile (x2 buf)
                + tm * hidden * w_itm                 # h scratch
                + 3 * tm * 128 * 4)                   # (tm,1) f32 scratches
    vmem_limit = int(min(96 * 2**20, max(32 * 2**20, 2 * vmem_est)))

    cost = pl.CostEstimate(
        flops=2 * Mpad * ((n_f + n_b) * hidden + hidden * V),
        transcendentals=Mpad * V,
        bytes_accessed=(Mpad * (n_f + n_b) * x_itm + Mpad * 4
                        + (n_f + n_b) * hidden * w_itm + hidden * V * w_itm
                        + Mpad * V * o_itm + Mpad * 4))

    grid_spec = pltpu.PrefetchScalarGridSpec(
        num_scalar_prefetch=0,
        grid=(G, NV),                                 # vocab (reduction) axis last
        in_specs=[
            pl.BlockSpec((tm, n_f), lambda i, j: (i, 0)),
            pl.BlockSpec((tm, n_b), lambda i, j: (i, 0)),
            pl.BlockSpec((1, 1, tm), lambda i, j: (i, 0, 0)),    # lane-dense tgt
            _const_weight_spec((n_f, hidden), lambda i, j: (0, 0)),
            _const_weight_spec((n_b, hidden), lambda i, j: (0, 0)),
            pl.BlockSpec((hidden, tv), lambda i, j: (0, j)),
        ],
        out_specs=[
            pl.BlockSpec((tm, tv), lambda i, j: (i, j)),
            pl.BlockSpec((1, 1, tm), lambda i, j: (i, 0, 0)),    # lane-dense loss
        ],
        scratch_shapes=[
            pltpu.VMEM((tm, hidden), matmul_dtype),   # layer-1 activations
            pltpu.VMEM((tm, 1), jnp.float32),         # running max
            pltpu.VMEM((tm, 1), jnp.float32),         # running sum(exp)
            pltpu.VMEM((tm, 1), jnp.float32),         # picked target logit
        ],
    )

    logits_flat, loss_rows = pl.pallas_call(
        _texthead_kernel,
        grid_spec=grid_spec,
        out_shape=(
            jax.ShapeDtypeStruct((Mpad, V), logits_dtype),
            jax.ShapeDtypeStruct((G, 1, tm), jnp.float32),
        ),
        compiler_params=pltpu.CompilerParams(
            dimension_semantics=("parallel", "arbitrary"),
            vmem_limit_bytes=vmem_limit),
        cost_estimate=cost,
    )(fwd, bwd, tgt, w1f, w1b, w2c)

    logits = logits_flat[:M].reshape(B, T, V)
    loss_before_mean = loss_rows.reshape(Mpad)[:M]
    loss = jnp.mean(loss_before_mean)
    return logits, loss_before_mean, loss


def _reference(forward_embedding, backward_embedding, w1, w2, targets):
    # Pure-f32 reference matching the PyTorch module.
    x = jnp.concatenate([forward_embedding, backward_embedding], axis=-1)
    h = x @ w1
    h = jnp.where(h > 0, h, LEAKY_SLOPE * h)
    logits = h @ w2
    V = logits.shape[-1]
    lf = logits.reshape(-1, V)
    t = targets.reshape(-1)
    lse = jax.nn.logsumexp(lf, axis=-1)
    picked = jnp.take_along_axis(lf, t[:, None], axis=-1)[:, 0]
    loss_rows = lse - picked
    return logits, loss_rows, jnp.mean(loss_rows)


if __name__ == "__main__":
    # Small config consistent with the module: n_f_enc, n_goal, vocab_size.
    B, T = 2, 8
    n_f_enc, n_goal = 32, 32
    hidden = 512
    vocab_size = 256

    key = jax.random.PRNGKey(0)
    k_f, k_b, k_w1, k_w2, k_t = jax.random.split(key, 5)

    forward_embedding = jax.random.normal(k_f, (B, T, n_f_enc), jnp.float32)
    backward_embedding = jax.random.normal(k_b, (B, T, n_goal), jnp.float32)
    targets = jax.random.randint(k_t, (B, T), 0, vocab_size, jnp.int32)

    # Deterministic init matching _init_weights: normal(0, 0.02), no bias.
    # Stored as (in_features, out_features) = W.T of PyTorch's (out, in).
    w1 = 0.02 * jax.random.normal(k_w1, (n_f_enc + n_goal, hidden), jnp.float32)
    w2 = 0.02 * jax.random.normal(k_w2, (hidden, vocab_size), jnp.float32)

    logits, loss_rows, loss = jax.block_until_ready(
        texthead_forward(forward_embedding, backward_embedding, w1, w2, targets))

    ref_logits, ref_loss_rows, ref_loss = _reference(
        forward_embedding, backward_embedding, w1, w2, targets)

    # Tolerances loosened vs. the f32 reference: matmuls use bf16 operands
    # (f32 accumulation) and logits are returned in bf16 by default.
    assert logits.shape == ref_logits.shape
    assert jnp.allclose(logits.astype(jnp.float32), ref_logits,
                        atol=2e-2, rtol=2e-2)
    assert jnp.allclose(loss_rows, ref_loss_rows, atol=2e-2, rtol=2e-2)
    assert jnp.allclose(loss, ref_loss, atol=2e-2, rtol=2e-2)

    print("KERNEL_OK")
</pallas_src>

<mosaic_0001>
module attributes {stable_mosaic.version = 11 : i64} {
  func.func @_texthead_kernel(%arg0: i32, %arg1: i32, %arg2: memref<8x32xf32, #tpu.memory_space<vmem>>, %arg3: memref<8x32xf32, #tpu.memory_space<vmem>>, %arg4: memref<1x1x8xi32, #tpu.memory_space<vmem>>, %arg5: memref<32x512xbf16, #tpu.memory_space<vmem>>, %arg6: memref<32x512xbf16, #tpu.memory_space<vmem>>, %arg7: memref<512x256xbf16, #tpu.memory_space<vmem>>, %arg8: memref<8x256xbf16, #tpu.memory_space<vmem>>, %arg9: memref<1x1x8xf32, #tpu.memory_space<vmem>>, %arg10: memref<8x512xbf16, #tpu.memory_space<vmem>>, %arg11: memref<8x1xf32, #tpu.memory_space<vmem>>, %arg12: memref<8x1xf32, #tpu.memory_space<vmem>>, %arg13: memref<8x1xf32, #tpu.memory_space<vmem>>) attributes {dimension_semantics = [#tpu.dimension_semantics<parallel>, #tpu.dimension_semantics<arbitrary>], iteration_bounds = array<i64: 2, 1>, scalar_prefetch = 0 : i64, scratch_operands = 4 : i64, tpu.core_type = #tpu.core_type<tc>, window_params = [{transform_indices = @transform_0, window_bounds = array<i64: 8, 32>}, {transform_indices = @transform_1, window_bounds = array<i64: 8, 32>}, {transform_indices = @transform_2, window_bounds = array<i64: 1, 1, 8>}, {pipeline_mode = #tpu.pipeline_mode<synchronous>, transform_indices = @transform_3, window_bounds = array<i64: 32, 512>}, {pipeline_mode = #tpu.pipeline_mode<synchronous>, transform_indices = @transform_4, window_bounds = array<i64: 32, 512>}, {transform_indices = @transform_5, window_bounds = array<i64: 512, 256>}, {transform_indices = @transform_6, window_bounds = array<i64: 8, 256>}, {transform_indices = @transform_7, window_bounds = array<i64: 1, 1, 8>}]} {
    %c0_i32 = arith.constant 0 : i32
    %0 = arith.cmpi eq, %arg1, %c0_i32 : i32
    %1 = arith.extui %0 : i1 to i32
    %c0_i32_0 = arith.constant 0 : i32
    %2 = arith.cmpi ne, %1, %c0_i32_0 : i32
    scf.if %2 {
      %c0_27 = arith.constant 0 : index
      %c0_28 = arith.constant 0 : index
      %43 = vector.load %arg2[%c0_27, %c0_28] : memref<8x32xf32, #tpu.memory_space<vmem>>, vector<8x32xf32>
      %44 = arith.truncf %43 : vector<8x32xf32> to vector<8x32xbf16>
      %c0_29 = arith.constant 0 : index
      %c0_30 = arith.constant 0 : index
      %45 = vector.load %arg5[%c0_29, %c0_30] : memref<32x512xbf16, #tpu.memory_space<vmem>>, vector<32x512xbf16>
      %cst_31 = arith.constant dense<0.000000e+00> : vector<8x512xf32>
      %46 = tpu.matmul %44, %45, %cst_31 {dimension_numbers = #tpu.dot_dimension_numbers<[1], [0], [0], [1], [0, 0, 1, 1], [], []>} : vector<8x32xbf16>, vector<32x512xbf16>, vector<8x512xf32> -> vector<8x512xf32>
      %c0_32 = arith.constant 0 : index
      %c0_33 = arith.constant 0 : index
      %47 = vector.load %arg3[%c0_32, %c0_33] : memref<8x32xf32, #tpu.memory_space<vmem>>, vector<8x32xf32>
      %48 = arith.truncf %47 : vector<8x32xf32> to vector<8x32xbf16>
      %c0_34 = arith.constant 0 : index
      %c0_35 = arith.constant 0 : index
      %49 = vector.load %arg6[%c0_34, %c0_35] : memref<32x512xbf16, #tpu.memory_space<vmem>>, vector<32x512xbf16>
      %cst_36 = arith.constant dense<0.000000e+00> : vector<8x512xf32>
      %50 = tpu.matmul %48, %49, %cst_36 {dimension_numbers = #tpu.dot_dimension_numbers<[1], [0], [0], [1], [0, 0, 1, 1], [], []>} : vector<8x32xbf16>, vector<32x512xbf16>, vector<8x512xf32> -> vector<8x512xf32>
      %51 = arith.addf %46, %50 : vector<8x512xf32>
      %cst_37 = arith.constant 0.000000e+00 : f32
      %52 = vector.broadcast %cst_37 : f32 to vector<8x512xf32>
      %53 = arith.cmpf ogt, %51, %52 : vector<8x512xf32>
      %cst_38 = arith.constant 0.00999999977 : f32
      %54 = vector.broadcast %cst_38 : f32 to vector<8x512xf32>
      %55 = arith.mulf %54, %51 : vector<8x512xf32>
      %56 = arith.select %53, %51, %55 : vector<8x512xi1>, vector<8x512xf32>
      %57 = arith.truncf %56 : vector<8x512xf32> to vector<8x512xbf16>
      %c0_39 = arith.constant 0 : index
      %c0_40 = arith.constant 0 : index
      %58 = vector.load %arg10[%c0_39, %c0_40] : memref<8x512xbf16, #tpu.memory_space<vmem>>, vector<8x512xbf16>
      tpu.vector_store %arg10[%c0_39, %c0_40], %57 {strides = array<i32>} : memref<8x512xbf16, #tpu.memory_space<vmem>>, vector<8x512xbf16>,
      %cst_41 = arith.constant 0xFF800000 : f32
      %59 = vector.broadcast %cst_41 : f32 to vector<8x1xf32>
      %c0_42 = arith.constant 0 : index
      %c0_43 = arith.constant 0 : index
      %60 = vector.load %arg11[%c0_42, %c0_43] : memref<8x1xf32, #tpu.memory_space<vmem>>, vector<8x1xf32>
      tpu.vector_store %arg11[%c0_42, %c0_43], %59 {strides = array<i32>} : memref<8x1xf32, #tpu.memory_space<vmem>>, vector<8x1xf32>,
      %cst_44 = arith.constant 0.000000e+00 : f32
      %61 = vector.broadcast %cst_44 : f32 to vector<8x1xf32>
      %c0_45 = arith.constant 0 : index
      %c0_46 = arith.constant 0 : index
      %62 = vector.load %arg12[%c0_45, %c0_46] : memref<8x1xf32, #tpu.memory_space<vmem>>, vector<8x1xf32>
      tpu.vector_store %arg12[%c0_45, %c0_46], %61 {strides = array<i32>} : memref<8x1xf32, #tpu.memory_space<vmem>>, vector<8x1xf32>,
      %cst_47 = arith.constant 0.000000e+00 : f32
      %63 = vector.broadcast %cst_47 : f32 to vector<8x1xf32>
      %c0_48 = arith.constant 0 : index
      %c0_49 = arith.constant 0 : index
      %64 = vector.load %arg13[%c0_48, %c0_49] : memref<8x1xf32, #tpu.memory_space<vmem>>, vector<8x1xf32>
      tpu.vector_store %arg13[%c0_48, %c0_49], %63 {strides = array<i32>} : memref<8x1xf32, #tpu.memory_space<vmem>>, vector<8x1xf32>,
    } else {
    }
    %c0 = arith.constant 0 : index
    %c0_1 = arith.constant 0 : index
    %3 = vector.load %arg10[%c0, %c0_1] : memref<8x512xbf16, #tpu.memory_space<vmem>>, vector<8x512xbf16>
    %c0_2 = arith.constant 0 : index
    %c0_3 = arith.constant 0 : index
    %4 = vector.load %arg7[%c0_2, %c0_3] : memref<512x256xbf16, #tpu.memory_space<vmem>>, vector<512x256xbf16>
    %cst = arith.constant dense<0.000000e+00> : vector<8x256xf32>
    %5 = tpu.matmul %3, %4, %cst {dimension_numbers = #tpu.dot_dimension_numbers<[1], [0], [0], [1], [0, 0, 1, 1], [], []>} : vector<8x512xbf16>, vector<512x256xbf16>, vector<8x256xf32> -> vector<8x256xf32>
    %6 = arith.truncf %5 : vector<8x256xf32> to vector<8x256xbf16>
    %c0_4 = arith.constant 0 : index
    %c0_5 = arith.constant 0 : index
    %7 = vector.load %arg8[%c0_4, %c0_5] : memref<8x256xbf16, #tpu.memory_space<vmem>>, vector<8x256xbf16>
    tpu.vector_store %arg8[%c0_4, %c0_5], %6 {strides = array<i32>} : memref<8x256xbf16, #tpu.memory_space<vmem>>, vector<8x256xbf16>,
    %c0_6 = arith.constant 0 : index
    %c0_7 = arith.constant 0 : index
    %8 = vector.load %arg11[%c0_6, %c0_7] : memref<8x1xf32, #tpu.memory_space<vmem>>, vector<8x1xf32>
    %cst_8 = arith.constant dense<0xFF800000> : vector<8xf32>
    %9 = vector.multi_reduction <maximumf>, %5, %cst_8 [1] : vector<8x256xf32> to vector<8xf32>
    %10 = vector.shape_cast %9 : vector<8xf32> to vector<8x1xf32>
    %11 = arith.maximumf %8, %10 : vector<8x1xf32>
    %12 = arith.subf %8, %11 : vector<8x1xf32>
    %13 = math.exp %12 : vector<8x1xf32>
    %c0_9 = arith.constant 0 : index
    %c0_10 = arith.constant 0 : index
    %14 = vector.load %arg12[%c0_9, %c0_10] : memref<8x1xf32, #tpu.memory_space<vmem>>, vector<8x1xf32>
    %15 = arith.mulf %13, %14 : vector<8x1xf32>
    %16 = vector.broadcast %11 : vector<8x1xf32> to vector<8x256xf32>
    %17 = arith.subf %5, %16 : vector<8x256xf32>
    %18 = math.exp %17 : vector<8x256xf32>
    %cst_11 = arith.constant dense<0.000000e+00> : vector<8xf32>
    %19 = vector.multi_reduction <add>, %18, %cst_11 [1] : vector<8x256xf32> to vector<8xf32>
    %20 = vector.shape_cast %19 : vector<8xf32> to vector<8x1xf32>
    %21 = arith.addf %15, %20 : vector<8x1xf32>
    %c0_12 = arith.constant 0 : index
    %c0_13 = arith.constant 0 : index
    %22 = vector.load %arg12[%c0_12, %c0_13] : memref<8x1xf32, #tpu.memory_space<vmem>>, vector<8x1xf32>
    tpu.vector_store %arg12[%c0_12, %c0_13], %21 {strides = array<i32>} : memref<8x1xf32, #tpu.memory_space<vmem>>, vector<8x1xf32>,
    %c0_14 = arith.constant 0 : index
    %c0_15 = arith.constant 0 : index
    %23 = vector.load %arg11[%c0_14, %c0_15] : memref<8x1xf32, #tpu.memory_space<vmem>>, vector<8x1xf32>
    tpu.vector_store %arg11[%c0_14, %c0_15], %11 {strides = array<i32>} : memref<8x1xf32, #tpu.memory_space<vmem>>, vector<8x1xf32>,
    %c0_16 = arith.constant 0 : index
    %c0_17 = arith.constant 0 : index
    %c0_18 = arith.constant 0 : index
    %24 = vector.load %arg4[%c0_16, %c0_17, %c0_18] : memref<1x1x8xi32, #tpu.memory_space<vmem>>, vector<1x1x8xi32>
    %25 = vector.shape_cast %24 : vector<1x1x8xi32> to vector<1x8xi32>
    %26 = tpu.transpose %25, [1, 0] : vector<1x8xi32> -> vector<8x1xi32>
    %27 = tpu.iota {dimensions = array<i32: 1>} : vector<8x256xi32>
    %c256_i32 = arith.constant 256 : i32
    %28 = arith.muli %arg1, %c256_i32 : i32
    %29 = vector.broadcast %28 : i32 to vector<8x256xi32>
    %30 = arith.addi %27, %29 : vector<8x256xi32>
    %c0_19 = arith.constant 0 : index
    %c0_20 = arith.constant 0 : index
    %31 = vector.load %arg13[%c0_19, %c0_20] : memref<8x1xf32, #tpu.memory_space<vmem>>, vector<8x1xf32>
    %32 = vector.broadcast %26 : vector<8x1xi32> to vector<8x256xi32>
    %33 = arith.cmpi eq, %30, %32 : vector<8x256xi32>
    %cst_21 = arith.constant 0.000000e+00 : f32
    %34 = vector.broadcast %cst_21 : f32 to vector<8x256xf32>
    %35 = arith.select %33, %5, %34 : vector<8x256xi1>, vector<8x256xf32>
    %cst_22 = arith.constant dense<0.000000e+00> : vector<8xf32>
    %36 = vector.multi_reduction <add>, %35, %cst_22 [1] : vector<8x256xf32> to vector<8xf32>
    %37 = vector.shape_cast %36 : vector<8xf32> to vector<8x1xf32>
    %38 = arith.addf %31, %37 : vector<8x1xf32>
    %c0_23 = arith.constant 0 : index
    %c0_24 = arith.constant 0 : index
    %39 = vector.load %arg13[%c0_23, %c0_24] : memref<8x1xf32, #tpu.memory_space<vmem>>, vector<8x1xf32>
    tpu.vector_store %arg13[%c0_23, %c0_24], %38 {strides = array<i32>} : memref<8x1xf32, #tpu.memory_space<vmem>>, vector<8x1xf32>,
    %c0_i32_25 = arith.constant 0 : i32
    %40 = arith.cmpi eq, %arg1, %c0_i32_25 : i32
    %41 = arith.extui %40 : i1 to i32
    %c0_i32_26 = arith.constant 0 : i32
    %42 = arith.cmpi ne, %41, %c0_i32_26 : i32
    scf.if %42 {
      %c0_27 = arith.constant 0 : index
      %c0_28 = arith.constant 0 : index
      %43 = vector.load %arg12[%c0_27, %c0_28] : memref<8x1xf32, #tpu.memory_space<vmem>>, vector<8x1xf32>
      %44 = math.log %43 : vector<8x1xf32>
      %c0_29 = arith.constant 0 : index
      %c0_30 = arith.constant 0 : index
      %45 = vector.load %arg11[%c0_29, %c0_30] : memref<8x1xf32, #tpu.memory_space<vmem>>, vector<8x1xf32>
      %46 = arith.addf %44, %45 : vector<8x1xf32>
      %c0_31 = arith.constant 0 : index
      %c0_32 = arith.constant 0 : index
      %47 = vector.load %arg13[%c0_31, %c0_32] : memref<8x1xf32, #tpu.memory_space<vmem>>, vector<8x1xf32>
      %48 = arith.subf %46, %47 : vector<8x1xf32>
      %49 = tpu.transpose %48, [1, 0] : vector<8x1xf32> -> vector<1x8xf32>
      %50 = vector.shape_cast %49 : vector<1x8xf32> to vector<1x1x8xf32>
      %c0_33 = arith.constant 0 : index
      %c0_34 = arith.constant 0 : index
      %c0_35 = arith.constant 0 : index
      %51 = vector.load %arg9[%c0_33, %c0_34, %c0_35] : memref<1x1x8xf32, #tpu.memory_space<vmem>>, vector<1x1x8xf32>
      tpu.vector_store %arg9[%c0_33, %c0_34, %c0_35], %50 {strides = array<i32>} : memref<1x1x8xf32, #tpu.memory_space<vmem>>, vector<1x1x8xf32>,
    } else {
    }
    return
  }
  func.func @transform_0(%arg0: i32, %arg1: i32) -> (i32, i32) {
    %c0_i32 = arith.constant 0 : i32
    %c0_i32_0 = arith.constant 0 : i32
    return %arg0, %c0_i32 : i32, i32
  }
  func.func @transform_1(%arg0: i32, %arg1: i32) -> (i32, i32) {
    %c0_i32 = arith.constant 0 : i32
    %c0_i32_0 = arith.constant 0 : i32
    return %arg0, %c0_i32 : i32, i32
  }
  func.func @transform_2(%arg0: i32, %arg1: i32) -> (i32, i32, i32) {
    %c0_i32 = arith.constant 0 : i32
    %c0_i32_0 = arith.constant 0 : i32
    %c0_i32_1 = arith.constant 0 : i32
    return %arg0, %c0_i32, %c0_i32_0 : i32, i32, i32
  }
  func.func @transform_3(%arg0: i32, %arg1: i32) -> (i32, i32) {
    %c0_i32 = arith.constant 0 : i32
    %c0_i32_0 = arith.constant 0 : i32
    %c0_i32_1 = arith.constant 0 : i32
    return %c0_i32, %c0_i32_0 : i32, i32
  }
  func.func @transform_4(%arg0: i32, %arg1: i32) -> (i32, i32) {
    %c0_i32 = arith.constant 0 : i32
    %c0_i32_0 = arith.constant 0 : i32
    %c0_i32_1 = arith.constant 0 : i32
    return %c0_i32, %c0_i32_0 : i32, i32
  }
  func.func @transform_5(%arg0: i32, %arg1: i32) -> (i32, i32) {
    %c0_i32 = arith.constant 0 : i32
    %c0_i32_0 = arith.constant 0 : i32
    return %c0_i32, %arg1 : i32, i32
  }
  func.func @transform_6(%arg0: i32, %arg1: i32) -> (i32, i32) {
    %c0_i32 = arith.constant 0 : i32
    return %arg0, %arg1 : i32, i32
  }
  func.func @transform_7(%arg0: i32, %arg1: i32) -> (i32, i32, i32) {
    %c0_i32 = arith.constant 0 : i32
    %c0_i32_0 = arith.constant 0 : i32
    %c0_i32_1 = arith.constant 0 : i32
    return %arg0, %c0_i32, %c0_i32_0 : i32, i32, i32
  }
}

</mosaic_0001>

<llo_original>
// kernel: texthead_forward.1
$region0: #{texthead_forward.1}
  #allocation0 [shape = 'u32[]', space=smem, size = 0x4, offset = 0x4, fixed_abs, tag = 'smem constant byte address 0x4 - core index']
  #allocation1 [shape = 'u32[144,128]{1,0:T(1,128)}', space=vmem, size = 0x12000, scoped, tag = 'internal scratch']
  #allocation2 [shape = 'bf16[8,512]{1,0:T(8,128)(2,1)}', space=vmem, size = 0x2000, scoped, tag = 'scratch operand']
  #allocation3 [shape = 'f32[8,1]{1,0:T(8,128)}', space=vmem, size = 0x1000, scoped, tag = 'scratch operand']
  #allocation4 [shape = 'f32[8,1]{1,0:T(8,128)}', space=vmem, size = 0x1000, scoped, tag = 'scratch operand']
  #allocation5 [shape = 'f32[8,1]{1,0:T(8,128)}', space=vmem, size = 0x1000, scoped, tag = 'scratch operand']
  %s0 = inlined_call_operand.vmem [shape: f32[16,32], index: 0, kind: input, shape index: {}]
  %s1 = inlined_call_operand.vmem [shape: f32[16,32], index: 1, kind: input, shape index: {}]
  %s2 = inlined_call_operand.vmem [shape: s32[2,1,8], index: 2, kind: input, shape index: {}]
  %s3 = inlined_call_operand.vmem [shape: bf16[32,512], index: 3, kind: input, shape index: {}]
  %s4 = inlined_call_operand.vmem [shape: bf16[32,512], index: 4, kind: input, shape index: {}]
  %s5 = inlined_call_operand.vmem [shape: bf16[512,256], index: 5, kind: input, shape index: {}]
  %s6 = inlined_call_operand.hbm [shape: bf16[16,256], index: 6, kind: output, shape index: {0}]
  %s7 = inlined_call_operand.vmem [shape: f32[2,1,8], index: 7, kind: output, shape index: {1}]
  %8 = xla_tuple %s6, %s7
  %s9 = sld [smem:[#allocation0]]
  $region73: #{texthead_forward.1} parent=0
    _
  %s11 = ssub.s32 1, %s9
  %s12 = scalar_select 0, %s11, %s9
  $region1: #{texthead_forward.1} parent=0
    #allocation6 [shape = 'u8[8192]{0}', space=vmem, size = 0x2000, scoped, tag = 'output window, operand 0']
    #allocation7 [shape = 's32[2]{0}', space=sflag, size = 0x8, scoped, tag = 'scoped memory for texthead_forward.1']
    %13 = vsyncpa [#allocation7], 0
    %s14 = scalar_lea.sflag [#allocation7], 1
    %15 = vsyncpa %s14, 0
    loop: start=0, step=1, limit=4
    $region2: #{texthead_forward.1} parent=1 // loop_pre_header
      _
    $region3: #{texthead_forward.1} parent=1 // loop_header
      %s17 = sphi 0, %s21
      %p18 = scmp.ge.s32.totalorder %s17, 4
      %s24 = sphi 0, %s36
      %s25 = sphi 0, %s32
      %s26 = sphi 0, %s24
      %s27 = sphi 0, %s25
      %s28 = sphi 0, %s26
      %s29 = sphi 0, %s27
      %s39 = sphi 0, %s41
      %s42 = sphi 0, %s39
      %s43 = sphi 0, %s42
      %s59 = sphi 0, %s43
      %s65 = sphi 0, %s67
      %s68 = sphi 0, %s65
      %s69 = sphi 0, %s68
      %s85 = sphi 0, %s69
      %s91 = sphi 0, %s93
      %s94 = sphi 0, %s91
      %s95 = sphi 0, %s94
      %s111 = sphi 0, %s95
      %s115 = sphi 0, %s115
      %s117 = sphi 0, %s115
      %s118 = sphi 0, %s117
      %s132 = sphi 0, %s118
      %s136 = sphi 0, %s136
      %s138 = sphi 0, %s136
      %s139 = sphi 0, %s138
      %s153 = sphi 0, %s139
      %s159 = sphi 0, %s161
      %s162 = sphi 0, %s159
      %s163 = sphi 0, %s162
      %s179 = sphi 0, %s163
      %s187 = sphi 0, %s189
      %s190 = sphi 0, %s187
      %s191 = sphi 0, %s190
      %s207 = sphi 0, %s191
      %s213 = sphi 0, %s215
      %s216 = sphi 0, %s213
      %s217 = sphi 0, %s216
      %s233 = sphi 0, %s217
    $region4: #{texthead_forward.1} parent=1 // loop_header_branch
      %20 = sbr.rel (%p18) target = $region8
    $region5: #{texthead_forward.1} parent=1 // loop_body
      %s22 = ssub.s32 %s17, 1
      %s23 = ssub.s32 %s17, 2
      %s30 = sadd.s32 1, %s25
      %p31 = scmp.ge.s32.totalorder %s30, 1
      %s32 = scalar_select %p31, 0, %s30
      %s33 = sadd.s32 1, %s24
      %s34 = scalar_select %p31, %s33, %s24
      %p35 = scmp.ge.s32.totalorder %s34, 2
      %s36 = scalar_select %p35, 0, %s34
      %s37 = ssub.s32 %s24, %s36
      %p38 = scmp.eq.s32.totalorder %s37, 0
      %s40 = sadd.s32 %s39, 1
      %s41 = scalar_select %p38, %s39, %s40
      %p44 = pneg %p38
      %p45 = scmp.eq.s32.totalorder %s17, 1
      %p46 = por %p44, %p45
      %p47 = scmp.ne.s32.totalorder %s39, %s42
      %p48 = scmp.eq.s32.totalorder %s17, 0
      %p49 = por %p47, %p48
      %p50 = scmp.ne.s32.totalorder %s39, %s42
      %p51 = scmp.eq.s32.totalorder %s22, 1
      %p52 = por %p50, %p51
      %p53 = scmp.ne.s32.totalorder %s42, %s43
      %p54 = scmp.eq.s32.totalorder %s22, 0
      %p55 = por %p53, %p54
      %p56 = scmp.ne.s32.totalorder %s42, %s43
      %p57 = scmp.eq.s32.totalorder %s23, 1
      %p58 = por %p56, %p57
      %p60 = scmp.ne.s32.totalorder %s43, %s59
      %p61 = scmp.eq.s32.totalorder %s23, 0
      %p62 = por %p60, %p61
      %s63 = ssub.s32 %s24, %s36
      %p64 = scmp.eq.s32.totalorder %s63, 0
      %s66 = sadd.s32 %s65, 1
      %s67 = scalar_select %p64, %s65, %s66
      %p70 = pneg %p64
      %p71 = scmp.eq.s32.totalorder %s17, 1
      %p72 = por %p70, %p71
      %p73 = scmp.ne.s32.totalorder %s65, %s68
      %p74 = scmp.eq.s32.totalorder %s17, 0
      %p75 = por %p73, %p74
      %p76 = scmp.ne.s32.totalorder %s65, %s68
      %p77 = scmp.eq.s32.totalorder %s22, 1
      %p78 = por %p76, %p77
      %p79 = scmp.ne.s32.totalorder %s68, %s69
      %p80 = scmp.eq.s32.totalorder %s22, 0
      %p81 = por %p79, %p80
      %p82 = scmp.ne.s32.totalorder %s68, %s69
      %p83 = scmp.eq.s32.totalorder %s23, 1
      %p84 = por %p82, %p83
      %p86 = scmp.ne.s32.totalorder %s69, %s85
      %p87 = scmp.eq.s32.totalorder %s23, 0
      %p88 = por %p86, %p87
      %s89 = ssub.s32 %s24, %s36
      %p90 = scmp.eq.s32.totalorder %s89, 0
      %s92 = sadd.s32 %s91, 1
      %s93 = scalar_select %p90, %s91, %s92
      %p96 = pneg %p90
      %p97 = scmp.eq.s32.totalorder %s17, 1
      %p98 = por %p96, %p97
      %p99 = scmp.ne.s32.totalorder %s91, %s94
      %p100 = scmp.eq.s32.totalorder %s17, 0
      %p101 = por %p99, %p100
      %p102 = scmp.ne.s32.totalorder %s91, %s94
      %p103 = scmp.eq.s32.totalorder %s22, 1
      %p104 = por %p102, %p103
      %p105 = scmp.ne.s32.totalorder %s94, %s95
      %p106 = scmp.eq.s32.totalorder %s22, 0
      %p107 = por %p105, %p106
      %p108 = scmp.ne.s32.totalorder %s94, %s95
      %p109 = scmp.eq.s32.totalorder %s23, 1
      %p110 = por %p108, %p109
      %p112 = scmp.ne.s32.totalorder %s95, %s111
      %p113 = scmp.eq.s32.totalorder %s23, 0
      %p114 = por %p112, %p113
      %s116 = sadd.s32 %s115, 1
      %p119 = scmp.eq.s32.totalorder %s17, 1
      %p120 = scmp.ne.s32.totalorder %s115, %s117
      %p121 = scmp.eq.s32.totalorder %s17, 0
      %p122 = por %p120, %p121
      %p123 = scmp.ne.s32.totalorder %s115, %s117
      %p124 = scmp.eq.s32.totalorder %s22, 1
      %p125 = por %p123, %p124
      %p126 = scmp.ne.s32.totalorder %s117, %s118
      %p127 = scmp.eq.s32.totalorder %s22, 0
      %p128 = por %p126, %p127
      %p129 = scmp.ne.s32.totalorder %s117, %s118
      %p130 = scmp.eq.s32.totalorder %s23, 1
      %p131 = por %p129, %p130
      %p133 = scmp.ne.s32.totalorder %s118, %s132
      %p134 = scmp.eq.s32.totalorder %s23, 0
      %p135 = por %p133, %p134
      %s137 = sadd.s32 %s136, 1
      %p140 = scmp.eq.s32.totalorder %s17, 1
      %p141 = scmp.ne.s32.totalorder %s136, %s138
      %p142 = scmp.eq.s32.totalorder %s17, 0
      %p143 = por %p141, %p142
      %p144 = scmp.ne.s32.totalorder %s136, %s138
      %p145 = scmp.eq.s32.totalorder %s22, 1
      %p146 = por %p144, %p145
      %p147 = scmp.ne.s32.totalorder %s138, %s139
      %p148 = scmp.eq.s32.totalorder %s22, 0
      %p149 = por %p147, %p148
      %p150 = scmp.ne.s32.totalorder %s138, %s139
      %p151 = scmp.eq.s32.totalorder %s23, 1
      %p152 = por %p150, %p151
      %p154 = scmp.ne.s32.totalorder %s139, %s153
      %p155 = scmp.eq.s32.totalorder %s23, 0
      %p156 = por %p154, %p155
      %s157 = ssub.s32 %s25, %s32
      %p158 = scmp.eq.s32.totalorder %s157, 0
      %s160 = sadd.s32 %s159, 1
      %s161 = scalar_select %p158, %s159, %s160
      %p164 = pneg %p158
      %p165 = scmp.eq.s32.totalorder %s17, 1
      %p166 = por %p164, %p165
      %p167 = scmp.ne.s32.totalorder %s159, %s162
      %p168 = scmp.eq.s32.totalorder %s17, 0
      %p169 = por %p167, %p168
      %p170 = scmp.ne.s32.totalorder %s159, %s162
      %p171 = scmp.eq.s32.totalorder %s22, 1
      %p172 = por %p170, %p171
      %p173 = scmp.ne.s32.totalorder %s162, %s163
      %p174 = scmp.eq.s32.totalorder %s22, 0
      %p175 = por %p173, %p174
      %p176 = scmp.ne.s32.totalorder %s162, %s163
      %p177 = scmp.eq.s32.totalorder %s23, 1
      %p178 = por %p176, %p177
      %p180 = scmp.ne.s32.totalorder %s163, %s179
      %p181 = scmp.eq.s32.totalorder %s23, 0
      %p182 = por %p180, %p181
      %s183 = ssub.s32 %s24, %s36
      %s184 = ssub.s32 %s25, %s32
      %s185 = sor.u32 %s183, %s184
      %p186 = scmp.eq.s32.totalorder %s185, 0
      %s188 = sadd.s32 %s187, 1
      %s189 = scalar_select %p186, %s187, %s188
      %p192 = pneg %p186
      %p193 = scmp.eq.s32.totalorder %s17, 1
      %p194 = por %p192, %p193
      %p195 = scmp.ne.s32.totalorder %s187, %s190
      %p196 = scmp.eq.s32.totalorder %s17, 0
      %p197 = por %p195, %p196
      %p198 = scmp.ne.s32.totalorder %s187, %s190
      %p199 = scmp.eq.s32.totalorder %s22, 1
      %p200 = por %p198, %p199
      %p201 = scmp.ne.s32.totalorder %s190, %s191
      %p202 = scmp.eq.s32.totalorder %s22, 0
      %p203 = por %p201, %p202
      %p204 = scmp.ne.s32.totalorder %s190, %s191
      %p205 = scmp.eq.s32.totalorder %s23, 1
      %p206 = por %p204, %p205
      %p208 = scmp.ne.s32.totalorder %s191, %s207
      %p209 = scmp.eq.s32.totalorder %s23, 0
      %p210 = por %p208, %p209
      %s211 = ssub.s32 %s24, %s36
      %p212 = scmp.eq.s32.totalorder %s211, 0
      %s214 = sadd.s32 %s213, 1
      %s215 = scalar_select %p212, %s213, %s214
      %p218 = pneg %p212
      %p219 = scmp.eq.s32.totalorder %s17, 1
      %p220 = por %p218, %p219
      %p221 = scmp.ne.s32.totalorder %s213, %s216
      %p222 = scmp.eq.s32.totalorder %s17, 0
      %p223 = por %p221, %p222
      %p224 = scmp.ne.s32.totalorder %s213, %s216
      %p225 = scmp.eq.s32.totalorder %s22, 1
      %p226 = por %p224, %p225
      %p227 = scmp.ne.s32.totalorder %s216, %s217
      %p228 = scmp.eq.s32.totalorder %s22, 0
      %p229 = por %p227, %p228
      %p230 = scmp.ne.s32.totalorder %s216, %s217
      %p231 = scmp.eq.s32.totalorder %s23, 1
      %p232 = por %p230, %p231
      %p234 = scmp.ne.s32.totalorder %s217, %s233
      %p235 = scmp.eq.s32.totalorder %s23, 0
      %p236 = por %p234, %p235
      %p237 = scmp.le.s32.totalorder 1, %s17
      %p238 = scmp.lt.s32.totalorder %s17, 3
      %p239 = pnand %p237, %p238
      %p240 = pneg %p239
      // Predicated region
      $region9: #{texthead_forward.1} parent=5 // pred_check
        _
      $region10: #{texthead_forward.1} parent=5 // pred_check_branch
        %242 = sbr.rel (%p239) target = $region12
      $region11: #{texthead_forward.1} parent=5 // pred_region
        %s243 = ssub.s32 %s17, 1
        // Predicated region
        $region13: #{texthead_forward.1} parent=11 // pred_check
          %p244 = pneg %p128
        $region14: #{texthead_forward.1} parent=11 // pred_check_branch
          %246 = sbr.rel (%p244) target = $region16
        $region15: #{texthead_forward.1} parent=11 // pred_region
          _
        $region16: #{texthead_forward.1} parent=11 // pred_fallthru
          _
        // Predicated region
        $region17: #{texthead_forward.1} parent=11 // pred_check
          %p247 = pneg %p149
        $region18: #{texthead_forward.1} parent=11 // pred_check_branch
          %249 = sbr.rel (%p247) target = $region20
        $region19: #{texthead_forward.1} parent=11 // pred_region
          _
        $region20: #{texthead_forward.1} parent=11 // pred_fallthru
          _
        // Predicated region
        $region21: #{texthead_forward.1} parent=11 // pred_check
          %p250 = pneg %p175
        $region22: #{texthead_forward.1} parent=11 // pred_check_branch
          %252 = sbr.rel (%p250) target = $region24
        $region23: #{texthead_forward.1} parent=11 // pred_region
          %s253 = smul.u32 2, %s27
          %p254 = scmp.lt.s32.totalorder %s253, 1
          %s255 = scalar_select %p254, %s253, 1
          %s256 = smul.addr %s255, 4
          %s257 = scalar_lea.vmem %s5, %s256
          %s258 = smul.u32 2, %s27
        $region24: #{texthead_forward.1} parent=11 // pred_fallthru
          _
      $region12: #{texthead_forward.1} parent=5 // pred_fallthru
        _
      %p259 = scmp.lt.s32.totalorder %s17, 2
      // Predicated region
      $region25: #{texthead_forward.1} parent=5 // pred_check
        %p260 = pneg %p259
      $region26: #{texthead_forward.1} parent=5 // pred_check_branch
        %262 = sbr.rel (%p260) target = $region28
      $region27: #{texthead_forward.1} parent=5 // pred_region
        // Predicated region
        $region29: #{texthead_forward.1} parent=27 // pred_check
          %p263 = pneg %p49
        $region30: #{texthead_forward.1} parent=27 // pred_check_branch
          %265 = sbr.rel (%p263) target = $region32
        $region31: #{texthead_forward.1} parent=27 // pred_region
          %p266 = scmp.lt.s32.totalorder %s24, 1
          %s267 = scalar_select %p266, %s24, 1
          %s268 = smul.addr %s267, 8
          %s269 = scalar_lea.vmem %s0, %s268
        $region32: #{texthead_forward.1} parent=27 // pred_fallthru
          _
        // Predicated region
        $region33: #{texthead_forward.1} parent=27 // pred_check
          %p270 = pneg %p75
        $region34: #{texthead_forward.1} parent=27 // pred_check_branch
          %272 = sbr.rel (%p270) target = $region36
        $region35: #{texthead_forward.1} parent=27 // pred_region
          %p273 = scmp.lt.s32.totalorder %s24, 1
          %s274 = scalar_select %p273, %s24, 1
          %s275 = smul.addr %s274, 8
          %s276 = scalar_lea.vmem %s1, %s275
        $region36: #{texthead_forward.1} parent=27 // pred_fallthru
          _
        // Predicated region
        $region37: #{texthead_forward.1} parent=27 // pred_check
          %p277 = pneg %p101
        $region38: #{texthead_forward.1} parent=27 // pred_check_branch
          %279 = sbr.rel (%p277) target = $region40
        $region39: #{texthead_forward.1} parent=27 // pred_region
          %p280 = scmp.lt.s32.totalorder %s24, 1
          %s281 = scalar_select %p280, %s24, 1
          %s282 = scalar_lea.vmem %s2, %s281
        $region40: #{texthead_forward.1} parent=27 // pred_fallthru
          _
      $region28: #{texthead_forward.1} parent=5 // pred_fallthru
        _
      %p283 = scmp.le.s32.totalorder 1, %s17
      %p284 = scmp.lt.s32.totalorder %s17, 3
      %p285 = pnand %p283, %p284
      %p286 = pneg %p285
      // Predicated region
      $region41: #{texthead_forward.1} parent=5 // pred_check
        _
      $region42: #{texthead_forward.1} parent=5 // pred_check_branch
        %288 = sbr.rel (%p285) target = $region44
      $region43: #{texthead_forward.1} parent=5 // pred_region
        %s289 = ssub.s32 %s17, 1
        %p290 = scmp.lt.s32.totalorder %s26, 1
        %s291 = scalar_select %p290, %s26, 1
        %s292 = smul.addr %s291, 8
        %s293 = scalar_lea.vmem %s0, %s292
        %p294 = pneg %p55
        %p295 = pneg %p52
        %p296 = scmp.lt.s32.totalorder %s26, 1
        %s297 = scalar_select %p296, %s26, 1
        %s298 = smul.addr %s297, 8
        %s299 = scalar_lea.vmem %s1, %s298
        %p300 = pneg %p81
        %p301 = pneg %p78
        %p302 = scmp.lt.s32.totalorder %s26, 1
        %s303 = scalar_select %p302, %s26, 1
        %s304 = scalar_lea.vmem %s2, %s303
        %p305 = pneg %p107
        %p306 = pneg %p104
        %p307 = pneg %p128
        %p308 = pneg %p125
        %p309 = pneg %p149
        %p310 = pneg %p146
        %s311 = smul.u32 2, %s27
        %p312 = scmp.lt.s32.totalorder %s311, 1
        %s313 = scalar_select %p312, %s311, 1
        %s314 = smul.addr %s313, 4
        %s315 = scalar_lea.vmem %s5, %s314
        %p316 = pneg %p175
        %p317 = pneg %p172
        %p318 = pneg %p203
        %p319 = pneg %p200
        %s320 = sand.u32 %s190, 1
        %s321 = scalar_lea.sflag [#allocation7], %s320
        %s322 = sand.u32 %s190, 1
        %s323 = smul.addr %s322, 8
        %s324 = scalar_lea.vmem [#allocation6], %s323
        %p325 = pneg %p229
        %p326 = pneg %p226
        %p327 = scmp.lt.s32.totalorder %s26, 1
        %s328 = scalar_select %p327, %s26, 1
        %s329 = scalar_lea.vmem %s7, %s328
        %p330 = scmp.lt.s32.totalorder %s26, 1
        %s331 = scalar_select %p330, %s26, 1
        %s332 = smul.addr %s331, 8
        %s333 = scalar_lea.vmem %s0, %s332
        %p334 = scmp.lt.s32.totalorder %s26, 1
        %s335 = scalar_select %p334, %s26, 1
        %s336 = smul.addr %s335, 8
        %s337 = scalar_lea.vmem %s1, %s336
        %p338 = scmp.lt.s32.totalorder %s26, 1
        %s339 = scalar_select %p338, %s26, 1
        %s340 = scalar_lea.vmem %s2, %s339
        %s341 = smul.u32 2, %s27
        %p342 = scmp.lt.s32.totalorder %s341, 1
        %s343 = scalar_select %p342, %s341, 1
        %s344 = smul.addr %s343, 4
        %s345 = scalar_lea.vmem %s5, %s344
        %s346 = smul.u32 2, %s27
        %s347 = smul.u32 2, %s27
        %p348 = scmp.lt.s32.totalorder %s26, 1
        %s349 = scalar_select %p348, %s26, 1
        %s350 = scalar_lea.vmem %s7, %s349
        %p352 = scmp.eq.s32.totalorder %s27, 0
        // Predicated region
        $region45: #{texthead_forward.1} parent=43 // pred_check
          %p353 = pneg %p352
        $region46: #{texthead_forward.1} parent=43 // pred_check_branch
          %355 = sbr.rel (%p353) target = $region48
        $region47: #{texthead_forward.1} parent=43 // pred_region
          %v356 = vld [vmem:[%s333] sm:$0xff]
          %v357 = vpack.c.bf16 %v356, %v356
          %v358 = vld [vmem:[%s3] sm:$0xff]
          %v359 = vld [vmem:[%s3 + $0x8] sm:$0xff]
          %v360 = vld [vmem:[%s3 + $0x10] sm:$0xff]
          %v361 = vld [vmem:[%s3 + $0x18] sm:$0xff]
          %v362 = vld [vmem:[%s3 + $0x20] sm:$0xff]
          %v363 = vld [vmem:[%s3 + $0x28] sm:$0xff]
          %v364 = vld [vmem:[%s3 + $0x30] sm:$0xff]
          %v365 = vld [vmem:[%s3 + $0x38] sm:$0xff]
          %v366 = vld [vmem:[%s337] sm:$0xff]
          %v367 = vpack.c.bf16 %v366, %v366
          %v368 = vld [vmem:[%s4] sm:$0xff]
          %v369 = vld [vmem:[%s4 + $0x8] sm:$0xff]
          %v370 = vld [vmem:[%s4 + $0x10] sm:$0xff]
          %v371 = vld [vmem:[%s4 + $0x18] sm:$0xff]
          %v372 = vld [vmem:[%s4 + $0x20] sm:$0xff]
          %v373 = vld [vmem:[%s4 + $0x28] sm:$0xff]
          %v374 = vld [vmem:[%s4 + $0x30] sm:$0xff]
          %v375 = vld [vmem:[%s4 + $0x38] sm:$0xff]
          %v384 = vunpack.c.l.b16 %v368
          %v385 = vunpack.c.h.b16 %v368
          %v386 = vunpack.c.l.b16 %v369
          %v387 = vunpack.c.h.b16 %v369
          %v388 = vunpack.c.l.b16 %v370
          %v389 = vunpack.c.h.b16 %v370
          %v390 = vunpack.c.l.b16 %v371
          %v391 = vunpack.c.h.b16 %v371
          %v392 = vunpack.c.l.b16 %v372
          %v393 = vunpack.c.h.b16 %v372
          %v394 = vunpack.c.l.b16 %v373
          %v395 = vunpack.c.h.b16 %v373
          %v396 = vunpack.c.l.b16 %v374
          %v397 = vunpack.c.h.b16 %v374
          %v398 = vunpack.c.l.b16 %v375
          %v399 = vunpack.c.h.b16 %v375
          %v400 = vpack.c.b16 %v388, %v384
          %v401 = vpack.c.b16 %v389, %v385
          %v402 = vpack.c.b16 %v390, %v386
          %v403 = vpack.c.b16 %v391, %v387
          %v404 = vpack.c.b16 %v396, %v392
          %v405 = vpack.c.b16 %v397, %v393
          %v406 = vpack.c.b16 %v398, %v394
          %v407 = vpack.c.b16 %v399, %v395
          %vm416 = vcmask 261120
          %v418 = vsel %vm416, %v367, 0
          %420 = vmatprep.subr.bf16.mxu0 0
          %421 = vmatpush1.bf16.msra.mxu0 0
          %422 = vmatprep.subr.bf16.mxu0 0
          %423 = vmatpush1.bf16.msra.mxu0 0
          %424 = vmatprep.subr.bf16.mxu0 0
          %425 = vmatpush1.bf16.msra.mxu0 0
          %426 = vmatprep.subr.bf16.mxu0 0
          %427 = vmatpush1.bf16.msra.mxu0 0
          %428 = vmatprep.subr.bf16.mxu0 0
          %429 = vmatpush1.bf16.msra.mxu0 0
          %430 = vmatprep.subr.bf16.mxu0 0
          %431 = vmatpush1.bf16.msra.mxu0 0
          %432 = vmatprep.subr.bf16.mxu0 %v405
          %433 = vmatpush1.bf16.msra.mxu0 %v404
          %434 = vmatprep.subr.bf16.mxu0 %v401
          %435 = vmatpush1.bf16.msra.mxu0 %v400
          %436 = vmatprep.subr.bf16.mxu0 0
          %437 = vmatpush2.bf16.msra.mxu0 0
          %438 = vmatprep.subr.bf16.mxu0 0
          %439 = vmatpush2.bf16.msra.mxu0 0
          %440 = vmatprep.subr.bf16.mxu0 0
          %441 = vmatpush2.bf16.msra.mxu0 0
          %442 = vmatprep.subr.bf16.mxu0 0
          %443 = vmatpush2.bf16.msra.mxu0 0
          %444 = vmatprep.subr.bf16.mxu0 0
          %445 = vmatpush2.bf16.msra.mxu0 0
          %446 = vmatprep.subr.bf16.mxu0 0
          %447 = vmatpush2.bf16.msra.mxu0 0
          %448 = vmatprep.subr.bf16.mxu0 0
          %449 = vmatpush2.bf16.msra.mxu0 0
          %450 = vmatprep.subr.bf16.mxu0 0
          %451 = vmatpush2.bf16.msra.mxu0 0
          %452 = vmatprep.mubr.bf16.mxu0 0
          %453 = vmatmul.mubr.bf16.gmra.mxu0 %v418
          %v454 = vpop.f32.mrf.mxu0
          %v455 = vadd.f32 0.0, %v454
          %v456 = vpop.f32.mrf.mxu0
          %v457 = vadd.f32 0.0, %v456
          %v458 = vpop.f32.mrf.mxu0
          %v459 = vpop.f32.mrf.mxu0
          %460 = vdwg.mxu0
          %461 = vmatprep.subr.bf16.mxu0 0
          %462 = vmatpush1.bf16.msra.mxu0 0
          %463 = vmatprep.subr.bf16.mxu0 0
          %464 = vmatpush1.bf16.msra.mxu0 0
          %465 = vmatprep.subr.bf16.mxu0 0
          %466 = vmatpush1.bf16.msra.mxu0 0
          %467 = vmatprep.subr.bf16.mxu0 0
          %468 = vmatpush1.bf16.msra.mxu0 0
          %469 = vmatprep.subr.bf16.mxu0 0
          %470 = vmatpush1.bf16.msra.mxu0 0
          %471 = vmatprep.subr.bf16.mxu0 0
          %472 = vmatpush1.bf16.msra.mxu0 0
          %473 = vmatprep.subr.bf16.mxu0 %v407
          %474 = vmatpush1.bf16.msra.mxu0 %v406
          %475 = vmatprep.subr.bf16.mxu0 %v403
          %476 = vmatpush1.bf16.msra.mxu0 %v402
          %477 = vmatprep.subr.bf16.mxu0 0
          %478 = vmatpush2.bf16.msra.mxu0 0
          %479 = vmatprep.subr.bf16.mxu0 0
          %480 = vmatpush2.bf16.msra.mxu0 0
          %481 = vmatprep.subr.bf16.mxu0 0
          %482 = vmatpush2.bf16.msra.mxu0 0
          %483 = vmatprep.subr.bf16.mxu0 0
          %484 = vmatpush2.bf16.msra.mxu0 0
          %485 = vmatprep.subr.bf16.mxu0 0
          %486 = vmatpush2.bf16.msra.mxu0 0
          %487 = vmatprep.subr.bf16.mxu0 0
          %488 = vmatpush2.bf16.msra.mxu0 0
          %489 = vmatprep.subr.bf16.mxu0 0
          %490 = vmatpush2.bf16.msra.mxu0 0
          %491 = vmatprep.subr.bf16.mxu0 0
          %492 = vmatpush2.bf16.msra.mxu0 0
          %493 = vmatprep.mubr.bf16.mxu0 0
          %494 = vmatmul.mubr.bf16.gmra.mxu0 %v418
          %v495 = vpop.f32.mrf.mxu0
          %v496 = vadd.f32 0.0, %v495
          %v497 = vpop.f32.mrf.mxu0
          %v498 = vadd.f32 0.0, %v497
          %v499 = vpop.f32.mrf.mxu0
          %v500 = vpop.f32.mrf.mxu0
          %501 = vdwg.mxu0
          %v510 = vunpack.c.l.b16 %v358
          %v511 = vunpack.c.h.b16 %v358
          %v512 = vunpack.c.l.b16 %v359
          %v513 = vunpack.c.h.b16 %v359
          %v514 = vunpack.c.l.b16 %v360
          %v515 = vunpack.c.h.b16 %v360
          %v516 = vunpack.c.l.b16 %v361
          %v517 = vunpack.c.h.b16 %v361
          %v518 = vunpack.c.l.b16 %v362
          %v519 = vunpack.c.h.b16 %v362
          %v520 = vunpack.c.l.b16 %v363
          %v521 = vunpack.c.h.b16 %v363
          %v522 = vunpack.c.l.b16 %v364
          %v523 = vunpack.c.h.b16 %v364
          %v524 = vunpack.c.l.b16 %v365
          %v525 = vunpack.c.h.b16 %v365
          %v526 = vpack.c.b16 %v514, %v510
          %v527 = vpack.c.b16 %v515, %v511
          %v528 = vpack.c.b16 %v516, %v512
          %v529 = vpack.c.b16 %v517, %v513
          %v530 = vpack.c.b16 %v522, %v518
          %v531 = vpack.c.b16 %v523, %v519
          %v532 = vpack.c.b16 %v524, %v520
          %v533 = vpack.c.b16 %v525, %v521
          %v543 = vsel %vm416, %v357, 0
          %545 = vmatprep.subr.bf16.mxu0 0
          %546 = vmatpush1.bf16.msra.mxu0 0
          %547 = vmatprep.subr.bf16.mxu0 0
          %548 = vmatpush1.bf16.msra.mxu0 0
          %549 = vmatprep.subr.bf16.mxu0 0
          %550 = vmatpush1.bf16.msra.mxu0 0
          %551 = vmatprep.subr.bf16.mxu0 0
          %552 = vmatpush1.bf16.msra.mxu0 0
          %553 = vmatprep.subr.bf16.mxu0 0
          %554 = vmatpush1.bf16.msra.mxu0 0
          %555 = vmatprep.subr.bf16.mxu0 0
          %556 = vmatpush1.bf16.msra.mxu0 0
          %557 = vmatprep.subr.bf16.mxu0 %v531
          %558 = vmatpush1.bf16.msra.mxu0 %v530
          %559 = vmatprep.subr.bf16.mxu0 %v527
          %560 = vmatpush1.bf16.msra.mxu0 %v526
          %561 = vmatprep.subr.bf16.mxu0 0
          %562 = vmatpush2.bf16.msra.mxu0 0
          %563 = vmatprep.subr.bf16.mxu0 0
          %564 = vmatpush2.bf16.msra.mxu0 0
          %565 = vmatprep.subr.bf16.mxu0 0
          %566 = vmatpush2.bf16.msra.mxu0 0
          %567 = vmatprep.subr.bf16.mxu0 0
          %568 = vmatpush2.bf16.msra.mxu0 0
          %569 = vmatprep.subr.bf16.mxu0 0
          %570 = vmatpush2.bf16.msra.mxu0 0
          %571 = vmatprep.subr.bf16.mxu0 0
          %572 = vmatpush2.bf16.msra.mxu0 0
          %573 = vmatprep.subr.bf16.mxu0 0
          %574 = vmatpush2.bf16.msra.mxu0 0
          %575 = vmatprep.subr.bf16.mxu0 0
          %576 = vmatpush2.bf16.msra.mxu0 0
          %577 = vmatprep.mubr.bf16.mxu0 0
          %578 = vmatmul.mubr.bf16.gmra.mxu0 %v543
          %v579 = vpop.f32.mrf.mxu0
          %v580 = vadd.f32 %v455, %v579
          %v581 = vpop.f32.mrf.mxu0
          %v582 = vadd.f32 %v457, %v581
          %v583 = vpop.f32.mrf.mxu0
          %v584 = vpop.f32.mrf.mxu0
          %585 = vdwg.mxu0
          %586 = vmatprep.subr.bf16.mxu0 0
          %587 = vmatpush1.bf16.msra.mxu0 0
          %588 = vmatprep.subr.bf16.mxu0 0
          %589 = vmatpush1.bf16.msra.mxu0 0
          %590 = vmatprep.subr.bf16.mxu0 0
          %591 = vmatpush1.bf16.msra.mxu0 0
          %592 = vmatprep.subr.bf16.mxu0 0
          %593 = vmatpush1.bf16.msra.mxu0 0
          %594 = vmatprep.subr.bf16.mxu0 0
          %595 = vmatpush1.bf16.msra.mxu0 0
          %596 = vmatprep.subr.bf16.mxu0 0
          %597 = vmatpush1.bf16.msra.mxu0 0
          %598 = vmatprep.subr.bf16.mxu0 %v533
          %599 = vmatpush1.bf16.msra.mxu0 %v532
          %600 = vmatprep.subr.bf16.mxu0 %v529
          %601 = vmatpush1.bf16.msra.mxu0 %v528
          %602 = vmatprep.subr.bf16.mxu0 0
          %603 = vmatpush2.bf16.msra.mxu0 0
          %604 = vmatprep.subr.bf16.mxu0 0
          %605 = vmatpush2.bf16.msra.mxu0 0
          %606 = vmatprep.subr.bf16.mxu0 0
          %607 = vmatpush2.bf16.msra.mxu0 0
          %608 = vmatprep.subr.bf16.mxu0 0
          %609 = vmatpush2.bf16.msra.mxu0 0
          %610 = vmatprep.subr.bf16.mxu0 0
          %611 = vmatpush2.bf16.msra.mxu0 0
          %612 = vmatprep.subr.bf16.mxu0 0
          %613 = vmatpush2.bf16.msra.mxu0 0
          %614 = vmatprep.subr.bf16.mxu0 0
          %615 = vmatpush2.bf16.msra.mxu0 0
          %616 = vmatprep.subr.bf16.mxu0 0
          %617 = vmatpush2.bf16.msra.mxu0 0
          %618 = vmatprep.mubr.bf16.mxu0 0
          %619 = vmatmul.mubr.bf16.gmra.mxu0 %v543
          %v620 = vpop.f32.mrf.mxu0
          %v621 = vadd.f32 %v496, %v620
          %v622 = vpop.f32.mrf.mxu0
          %v623 = vadd.f32 %v498, %v622
          %v624 = vpop.f32.mrf.mxu0
          %v625 = vpop.f32.mrf.mxu0
          %626 = vdwg.mxu0
          %vm627 = vcmp.gt.f32.partialorder %v580, 0.0
          %vm628 = vcmp.gt.f32.partialorder %v582, 0.0
          %vm629 = vcmp.gt.f32.partialorder %v621, 0.0
          %vm630 = vcmp.gt.f32.partialorder %v623, 0.0
          %v631 = vmul.f32 %v580, 0.01
          %v632 = vmul.f32 %v582, 0.01
          %v633 = vmul.f32 %v621, 0.01
          %v634 = vmul.f32 %v623, 0.01
          %v635 = vsel %vm627, %v580, %v631
          %v636 = vsel %vm628, %v582, %v632
          %v637 = vsel %vm629, %v621, %v633
          %v638 = vsel %vm630, %v623, %v634
          %v639 = vpack.c.bf16 %v635, %v635
          %v640 = vpack.c.bf16 %v636, %v636
          %v641 = vpack.c.bf16 %v637, %v637
          %v642 = vpack.c.bf16 %v638, %v638
          %v647 = vunpack.c.l.b16 %v639
          %v648 = vunpack.c.l.b16 %v640
          %v649 = vunpack.c.l.b16 %v641
          %v650 = vunpack.c.l.b16 %v642
          %v651 = vpack.c.b16 %v648, %v647
          %v652 = vpack.c.b16 %v650, %v649
          %655 = vst [vmem:[#allocation2] sm:$0xff] %v651
          %656 = vst [vmem:[#allocation2 + $0x8] sm:$0xff] %v652
          %vm657 = vcmask 7168
          %658 = vst.msk [vmem:[#allocation3] sm:$0xff] %vm657, -inf
          %659 = vst.msk [vmem:[#allocation4] sm:$0xff] %vm657, 0.0
          %660 = vst.msk [vmem:[#allocation5] sm:$0xff] %vm657, 0.0
        $region48: #{texthead_forward.1} parent=43 // pred_fallthru
          _
        %v661 = vld [vmem:[#allocation2] sm:$0xff]
        %v662 = vld [vmem:[#allocation2 + $0x8] sm:$0xff]
        %v663 = vld [vmem:[%s345] sm:$0xff]
        %v664 = vld [vmem:[%s345 + $0x8] sm:$0xff]
        %v665 = vld [vmem:[%s345 + $0x10] sm:$0xff]
        %v666 = vld [vmem:[%s345 + $0x18] sm:$0xff]
        %v667 = vld [vmem:[%s345 + $0x20] sm:$0xff]
        %v668 = vld [vmem:[%s345 + $0x28] sm:$0xff]
        %v669 = vld [vmem:[%s345 + $0x30] sm:$0xff]
        %v670 = vld [vmem:[%s345 + $0x38] sm:$0xff]
        %v671 = vld [vmem:[%s345 + $0x40] sm:$0xff]
        %v672 = vld [vmem:[%s345 + $0x48] sm:$0xff]
        %v673 = vld [vmem:[%s345 + $0x50] sm:$0xff]
        %v674 = vld [vmem:[%s345 + $0x58] sm:$0xff]
        %v675 = vld [vmem:[%s345 + $0x60] sm:$0xff]
        %v676 = vld [vmem:[%s345 + $0x68] sm:$0xff]
        %v677 = vld [vmem:[%s345 + $0x70] sm:$0xff]
        %v678 = vld [vmem:[%s345 + $0x78] sm:$0xff]
        %v679 = vld [vmem:[%s345 + $0x80] sm:$0xff]
        %v680 = vld [vmem:[%s345 + $0x88] sm:$0xff]
        %v681 = vld [vmem:[%s345 + $0x90] sm:$0xff]
        %v682 = vld [vmem:[%s345 + $0x98] sm:$0xff]
        %v683 = vld [vmem:[%s345 + $0xa0] sm:$0xff]
        %v684 = vld [vmem:[%s345 + $0xa8] sm:$0xff]
        %v685 = vld [vmem:[%s345 + $0xb0] sm:$0xff]
        %v686 = vld [vmem:[%s345 + $0xb8] sm:$0xff]
        %v687 = vld [vmem:[%s345 + $0xc0] sm:$0xff]
        %v688 = vld [vmem:[%s345 + $0xc8] sm:$0xff]
        %v689 = vld [vmem:[%s345 + $0xd0] sm:$0xff]
        %v690 = vld [vmem:[%s345 + $0xd8] sm:$0xff]
        %v691 = vld [vmem:[%s345 + $0xe0] sm:$0xff]
        %v692 = vld [vmem:[%s345 + $0xe8] sm:$0xff]
        %v693 = vld [vmem:[%s345 + $0xf0] sm:$0xff]
        %v694 = vld [vmem:[%s345 + $0xf8] sm:$0xff]
        %v695 = vld [vmem:[%s345 + $0x100] sm:$0xff]
        %v696 = vld [vmem:[%s345 + $0x108] sm:$0xff]
        %v697 = vld [vmem:[%s345 + $0x110] sm:$0xff]
        %v698 = vld [vmem:[%s345 + $0x118] sm:$0xff]
        %v699 = vld [vmem:[%s345 + $0x120] sm:$0xff]
        %v700 = vld [vmem:[%s345 + $0x128] sm:$0xff]
        %v701 = vld [vmem:[%s345 + $0x130] sm:$0xff]
        %v702 = vld [vmem:[%s345 + $0x138] sm:$0xff]
        %v703 = vld [vmem:[%s345 + $0x140] sm:$0xff]
        %v704 = vld [vmem:[%s345 + $0x148] sm:$0xff]
        %v705 = vld [vmem:[%s345 + $0x150] sm:$0xff]
        %v706 = vld [vmem:[%s345 + $0x158] sm:$0xff]
        %v707 = vld [vmem:[%s345 + $0x160] sm:$0xff]
        %v708 = vld [vmem:[%s345 + $0x168] sm:$0xff]
        %v709 = vld [vmem:[%s345 + $0x170] sm:$0xff]
        %v710 = vld [vmem:[%s345 + $0x178] sm:$0xff]
        %v711 = vld [vmem:[%s345 + $0x180] sm:$0xff]
        %v712 = vld [vmem:[%s345 + $0x188] sm:$0xff]
        %v713 = vld [vmem:[%s345 + $0x190] sm:$0xff]
        %v714 = vld [vmem:[%s345 + $0x198] sm:$0xff]
        %v715 = vld [vmem:[%s345 + $0x1a0] sm:$0xff]
        %v716 = vld [vmem:[%s345 + $0x1a8] sm:$0xff]
        %v717 = vld [vmem:[%s345 + $0x1b0] sm:$0xff]
        %v718 = vld [vmem:[%s345 + $0x1b8] sm:$0xff]
        %v719 = vld [vmem:[%s345 + $0x1c0] sm:$0xff]
        %v720 = vld [vmem:[%s345 + $0x1c8] sm:$0xff]
        %v721 = vld [vmem:[%s345 + $0x1d0] sm:$0xff]
        %v722 = vld [vmem:[%s345 + $0x1d8] sm:$0xff]
        %v723 = vld [vmem:[%s345 + $0x1e0] sm:$0xff]
        %v724 = vld [vmem:[%s345 + $0x1e8] sm:$0xff]
        %v725 = vld [vmem:[%s345 + $0x1f0] sm:$0xff]
        %v726 = vld [vmem:[%s345 + $0x1f8] sm:$0xff]
        %v729 = vunpack.c.l.b16 %v661
        %v730 = vunpack.c.h.b16 %v661
        %v731 = vunpack.c.l.b16 %v662
        %v732 = vunpack.c.h.b16 %v662
        %v733 = vpack.c.b16 %v729, %v729
        %v734 = vpack.c.b16 %v730, %v730
        %v735 = vpack.c.b16 %v731, %v731
        %v736 = vpack.c.b16 %v732, %v732
        %v805 = vunpack.c.l.b16 %v663
        %v806 = vunpack.c.h.b16 %v663
        %v807 = vunpack.c.l.b16 %v664
        %v808 = vunpack.c.h.b16 %v664
        %v809 = vunpack.c.l.b16 %v665
        %v810 = vunpack.c.h.b16 %v665
        %v811 = vunpack.c.l.b16 %v666
        %v812 = vunpack.c.h.b16 %v666
        %v813 = vunpack.c.l.b16 %v667
        %v814 = vunpack.c.h.b16 %v667
        %v815 = vunpack.c.l.b16 %v668
        %v816 = vunpack.c.h.b16 %v668
        %v817 = vunpack.c.l.b16 %v669
        %v818 = vunpack.c.h.b16 %v669
        %v819 = vunpack.c.l.b16 %v670
        %v820 = vunpack.c.h.b16 %v670
        %v821 = vunpack.c.l.b16 %v671
        %v822 = vunpack.c.h.b16 %v671
        %v823 = vunpack.c.l.b16 %v672
        %v824 = vunpack.c.h.b16 %v672
        %v825 = vunpack.c.l.b16 %v673
        %v826 = vunpack.c.h.b16 %v673
        %v827 = vunpack.c.l.b16 %v674
        %v828 = vunpack.c.h.b16 %v674
        %v829 = vunpack.c.l.b16 %v675
        %v830 = vunpack.c.h.b16 %v675
        %v831 = vunpack.c.l.b16 %v676
        %v832 = vunpack.c.h.b16 %v676
        %v833 = vunpack.c.l.b16 %v677
        %v834 = vunpack.c.h.b16 %v677
        %v835 = vunpack.c.l.b16 %v678
        %v836 = vunpack.c.h.b16 %v678
        %v837 = vunpack.c.l.b16 %v679
        %v838 = vunpack.c.h.b16 %v679
        %v839 = vunpack.c.l.b16 %v680
        %v840 = vunpack.c.h.b16 %v680
        %v841 = vunpack.c.l.b16 %v681
        %v842 = vunpack.c.h.b16 %v681
        %v843 = vunpack.c.l.b16 %v682
        %v844 = vunpack.c.h.b16 %v682
        %v845 = vunpack.c.l.b16 %v683
        %v846 = vunpack.c.h.b16 %v683
        %v847 = vunpack.c.l.b16 %v684
        %v848 = vunpack.c.h.b16 %v684
        %v849 = vunpack.c.l.b16 %v685
        %v850 = vunpack.c.h.b16 %v685
        %v851 = vunpack.c.l.b16 %v686
        %v852 = vunpack.c.h.b16 %v686
        %v853 = vunpack.c.l.b16 %v687
        %v854 = vunpack.c.h.b16 %v687
        %v855 = vunpack.c.l.b16 %v688
        %v856 = vunpack.c.h.b16 %v688
        %v857 = vunpack.c.l.b16 %v689
        %v858 = vunpack.c.h.b16 %v689
        %v859 = vunpack.c.l.b16 %v690
        %v860 = vunpack.c.h.b16 %v690
        %v861 = vunpack.c.l.b16 %v691
        %v862 = vunpack.c.h.b16 %v691
        %v863 = vunpack.c.l.b16 %v692
        %v864 = vunpack.c.h.b16 %v692
        %v865 = vunpack.c.l.b16 %v693
        %v866 = vunpack.c.h.b16 %v693
        %v867 = vunpack.c.l.b16 %v694
        %v868 = vunpack.c.h.b16 %v694
        %v869 = vunpack.c.l.b16 %v695
        %v870 = vunpack.c.h.b16 %v695
        %v871 = vunpack.c.l.b16 %v696
        %v872 = vunpack.c.h.b16 %v696
        %v873 = vunpack.c.l.b16 %v697
        %v874 = vunpack.c.h.b16 %v697
        %v875 = vunpack.c.l.b16 %v698
        %v876 = vunpack.c.h.b16 %v698
        %v877 = vunpack.c.l.b16 %v699
        %v878 = vunpack.c.h.b16 %v699
        %v879 = vunpack.c.l.b16 %v700
        %v880 = vunpack.c.h.b16 %v700
        %v881 = vunpack.c.l.b16 %v701
        %v882 = vunpack.c.h.b16 %v701
        %v883 = vunpack.c.l.b16 %v702
        %v884 = vunpack.c.h.b16 %v702
        %v885 = vunpack.c.l.b16 %v703
        %v886 = vunpack.c.h.b16 %v703
        %v887 = vunpack.c.l.b16 %v704
        %v888 = vunpack.c.h.b16 %v704
        %v889 = vunpack.c.l.b16 %v705
        %v890 = vunpack.c.h.b16 %v705
        %v891 = vunpack.c.l.b16 %v706
        %v892 = vunpack.c.h.b16 %v706
        %v893 = vunpack.c.l.b16 %v707
        %v894 = vunpack.c.h.b16 %v707
        %v895 = vunpack.c.l.b16 %v708
        %v896 = vunpack.c.h.b16 %v708
        %v897 = vunpack.c.l.b16 %v709
        %v898 = vunpack.c.h.b16 %v709
        %v899 = vunpack.c.l.b16 %v710
        %v900 = vunpack.c.h.b16 %v710
        %v901 = vunpack.c.l.b16 %v711
        %v902 = vunpack.c.h.b16 %v711
        %v903 = vunpack.c.l.b16 %v712
        %v904 = vunpack.c.h.b16 %v712
        %v905 = vunpack.c.l.b16 %v713
        %v906 = vunpack.c.h.b16 %v713
        %v907 = vunpack.c.l.b16 %v714
        %v908 = vunpack.c.h.b16 %v714
        %v909 = vunpack.c.l.b16 %v715
        %v910 = vunpack.c.h.b16 %v715
        %v911 = vunpack.c.l.b16 %v716
        %v912 = vunpack.c.h.b16 %v716
        %v913 = vunpack.c.l.b16 %v717
        %v914 = vunpack.c.h.b16 %v717
        %v915 = vunpack.c.l.b16 %v718
        %v916 = vunpack.c.h.b16 %v718
        %v917 = vunpack.c.l.b16 %v719
        %v918 = vunpack.c.h.b16 %v719
        %v919 = vunpack.c.l.b16 %v720
        %v920 = vunpack.c.h.b16 %v720
        %v921 = vunpack.c.l.b16 %v721
        %v922 = vunpack.c.h.b16 %v721
        %v923 = vunpack.c.l.b16 %v722
        %v924 = vunpack.c.h.b16 %v722
        %v925 = vunpack.c.l.b16 %v723
        %v926 = vunpack.c.h.b16 %v723
        %v927 = vunpack.c.l.b16 %v724
        %v928 = vunpack.c.h.b16 %v724
        %v929 = vunpack.c.l.b16 %v725
        %v930 = vunpack.c.h.b16 %v725
        %v931 = vunpack.c.l.b16 %v726
        %v932 = vunpack.c.h.b16 %v726
        %v933 = vpack.c.b16 %v807, %v805
        %v934 = vpack.c.b16 %v808, %v806
        %v935 = vpack.c.b16 %v811, %v809
        %v936 = vpack.c.b16 %v812, %v810
        %v937 = vpack.c.b16 %v815, %v813
        %v938 = vpack.c.b16 %v816, %v814
        %v939 = vpack.c.b16 %v819, %v817
        %v940 = vpack.c.b16 %v820, %v818
        %v941 = vpack.c.b16 %v823, %v821
        %v942 = vpack.c.b16 %v824, %v822
        %v943 = vpack.c.b16 %v827, %v825
        %v944 = vpack.c.b16 %v828, %v826
        %v945 = vpack.c.b16 %v831, %v829
        %v946 = vpack.c.b16 %v832, %v830
        %v947 = vpack.c.b16 %v835, %v833
        %v948 = vpack.c.b16 %v836, %v834
        %v949 = vpack.c.b16 %v839, %v837
        %v950 = vpack.c.b16 %v840, %v838
        %v951 = vpack.c.b16 %v843, %v841
        %v952 = vpack.c.b16 %v844, %v842
        %v953 = vpack.c.b16 %v847, %v845
        %v954 = vpack.c.b16 %v848, %v846
        %v955 = vpack.c.b16 %v851, %v849
        %v956 = vpack.c.b16 %v852, %v850
        %v957 = vpack.c.b16 %v855, %v853
        %v958 = vpack.c.b16 %v856, %v854
        %v959 = vpack.c.b16 %v859, %v857
        %v960 = vpack.c.b16 %v860, %v858
        %v961 = vpack.c.b16 %v863, %v861
        %v962 = vpack.c.b16 %v864, %v862
        %v963 = vpack.c.b16 %v867, %v865
        %v964 = vpack.c.b16 %v868, %v866
        %v965 = vpack.c.b16 %v871, %v869
        %v966 = vpack.c.b16 %v872, %v870
        %v967 = vpack.c.b16 %v875, %v873
        %v968 = vpack.c.b16 %v876, %v874
        %v969 = vpack.c.b16 %v879, %v877
        %v970 = vpack.c.b16 %v880, %v878
        %v971 = vpack.c.b16 %v883, %v881
        %v972 = vpack.c.b16 %v884, %v882
        %v973 = vpack.c.b16 %v887, %v885
        %v974 = vpack.c.b16 %v888, %v886
        %v975 = vpack.c.b16 %v891, %v889
        %v976 = vpack.c.b16 %v892, %v890
        %v977 = vpack.c.b16 %v895, %v893
        %v978 = vpack.c.b16 %v896, %v894
        %v979 = vpack.c.b16 %v899, %v897
        %v980 = vpack.c.b16 %v900, %v898
        %v981 = vpack.c.b16 %v903, %v901
        %v982 = vpack.c.b16 %v904, %v902
        %v983 = vpack.c.b16 %v907, %v905
        %v984 = vpack.c.b16 %v908, %v906
        %v985 = vpack.c.b16 %v911, %v909
        %v986 = vpack.c.b16 %v912, %v910
        %v987 = vpack.c.b16 %v915, %v913
        %v988 = vpack.c.b16 %v916, %v914
        %v989 = vpack.c.b16 %v919, %v917
        %v990 = vpack.c.b16 %v920, %v918
        %v991 = vpack.c.b16 %v923, %v921
        %v992 = vpack.c.b16 %v924, %v922
        %v993 = vpack.c.b16 %v927, %v925
        %v994 = vpack.c.b16 %v928, %v926
        %v995 = vpack.c.b16 %v931, %v929
        %v996 = vpack.c.b16 %v932, %v930
        %1061 = vmatprep.subr.bf16.mxu0 %v948
        %1062 = vmatpush1.bf16.msra.mxu0 %v947
        %1063 = vmatprep.subr.bf16.mxu0 %v946
        %1064 = vmatpush1.bf16.msra.mxu0 %v945
        %1065 = vmatprep.subr.bf16.mxu0 %v944
        %1066 = vmatpush1.bf16.msra.mxu0 %v943
        %1067 = vmatprep.subr.bf16.mxu0 %v942
        %1068 = vmatpush1.bf16.msra.mxu0 %v941
        %1069 = vmatprep.subr.bf16.mxu0 %v940
        %1070 = vmatpush1.bf16.msra.mxu0 %v939
        %1071 = vmatprep.subr.bf16.mxu0 %v938
        %1072 = vmatpush1.bf16.msra.mxu0 %v937
        %1073 = vmatprep.subr.bf16.mxu0 %v936
        %1074 = vmatpush1.bf16.msra.mxu0 %v935
        %1075 = vmatprep.subr.bf16.mxu0 %v934
        %1076 = vmatpush1.bf16.msra.mxu0 %v933
        %1077 = vmatprep.subr.bf16.mxu0 %v964
        %1078 = vmatpush2.bf16.msra.mxu0 %v963
        %1079 = vmatprep.subr.bf16.mxu0 %v962
        %1080 = vmatpush2.bf16.msra.mxu0 %v961
        %1081 = vmatprep.subr.bf16.mxu0 %v960
        %1082 = vmatpush2.bf16.msra.mxu0 %v959
        %1083 = vmatprep.subr.bf16.mxu0 %v958
        %1084 = vmatpush2.bf16.msra.mxu0 %v957
        %1085 = vmatprep.subr.bf16.mxu0 %v956
        %1086 = vmatpush2.bf16.msra.mxu0 %v955
        %1087 = vmatprep.subr.bf16.mxu0 %v954
        %1088 = vmatpush2.bf16.msra.mxu0 %v953
        %1089 = vmatprep.subr.bf16.mxu0 %v952
        %1090 = vmatpush2.bf16.msra.mxu0 %v951
        %1091 = vmatprep.subr.bf16.mxu0 %v950
        %1092 = vmatpush2.bf16.msra.mxu0 %v949
        %1093 = vmatprep.mubr.bf16.mxu0 %v734
        %1094 = vmatmul.mubr.bf16.gmra.mxu0 %v733
        %v1095 = vpop.f32.mrf.mxu0
        %v1096 = vadd.f32 0.0, %v1095
        %v1097 = vpop.f32.mrf.mxu0
        %v1098 = vadd.f32 0.0, %v1097
        %v1099 = vpop.f32.mrf.mxu0
        %v1100 = vpop.f32.mrf.mxu0
        %1101 = vdwg.mxu0
        %1102 = vmatprep.subr.bf16.mxu0 %v980
        %1103 = vmatpush1.bf16.msra.mxu0 %v979
        %1104 = vmatprep.subr.bf16.mxu0 %v978
        %1105 = vmatpush1.bf16.msra.mxu0 %v977
        %1106 = vmatprep.subr.bf16.mxu0 %v976
        %1107 = vmatpush1.bf16.msra.mxu0 %v975
        %1108 = vmatprep.subr.bf16.mxu0 %v974
        %1109 = vmatpush1.bf16.msra.mxu0 %v973
        %1110 = vmatprep.subr.bf16.mxu0 %v972
        %1111 = vmatpush1.bf16.msra.mxu0 %v971
        %1112 = vmatprep.subr.bf16.mxu0 %v970
        %1113 = vmatpush1.bf16.msra.mxu0 %v969
        %1114 = vmatprep.subr.bf16.mxu0 %v968
        %1115 = vmatpush1.bf16.msra.mxu0 %v967
        %1116 = vmatprep.subr.bf16.mxu0 %v966
        %1117 = vmatpush1.bf16.msra.mxu0 %v965
        %1118 = vmatprep.subr.bf16.mxu0 %v996
        %1119 = vmatpush2.bf16.msra.mxu0 %v995
        %1120 = vmatprep.subr.bf16.mxu0 %v994
        %1121 = vmatpush2.bf16.msra.mxu0 %v993
        %1122 = vmatprep.subr.bf16.mxu0 %v992
        %1123 = vmatpush2.bf16.msra.mxu0 %v991
        %1124 = vmatprep.subr.bf16.mxu0 %v990
        %1125 = vmatpush2.bf16.msra.mxu0 %v989
        %1126 = vmatprep.subr.bf16.mxu0 %v988
        %1127 = vmatpush2.bf16.msra.mxu0 %v987
        %1128 = vmatprep.subr.bf16.mxu0 %v986
        %1129 = vmatpush2.bf16.msra.mxu0 %v985
        %1130 = vmatprep.subr.bf16.mxu0 %v984
        %1131 = vmatpush2.bf16.msra.mxu0 %v983
        %1132 = vmatprep.subr.bf16.mxu0 %v982
        %1133 = vmatpush2.bf16.msra.mxu0 %v981
        %1134 = vmatprep.mubr.bf16.mxu0 %v736
        %1135 = vmatmul.mubr.bf16.gmra.mxu0 %v735
        %v1136 = vpop.f32.mrf.mxu0
        %v1137 = vadd.f32 %v1096, %v1136
        %v1138 = vpop.f32.mrf.mxu0
        %v1139 = vadd.f32 %v1098, %v1138
        %v1140 = vpop.f32.mrf.mxu0
        %v1141 = vpop.f32.mrf.mxu0
        %1142 = vdwg.mxu0
        %v1143 = vpack.c.bf16 %v1137, %v1137
        %v1144 = vpack.c.bf16 %v1139, %v1139
        %v1147 = vunpack.c.l.b16 %v1143
        %v1148 = vunpack.c.l.b16 %v1144
        %v1149 = vpack.c.b16 %v1148, %v1147
        %1151 = vst [vmem:[%s324] sm:$0xff] %v1149
        %v1152 = vld [vmem:[#allocation3] sm:$0xff]
        %v1153 = vmax.f32 %v1137, %v1139
        %1154 = vmax.xlane.f32.xlu0 %v1153
        %v1155 = vpop.xlane.xlu0 %1154
        %v1156 = vmax.f32 %v1152, %v1155
        %v1157 = vsub.f32 %v1152, %v1156
        %v1158 = vmul.f32 %v1157, 1.442695
        %v1159 = vpow.pop %v1158
        %v1160 = vld [vmem:[#allocation4] sm:$0xff]
        %v1161 = vmul.f32 %v1159, %v1160
        %1163 = vset.pattern.permute.xlu0 0
        %1164 = vperm.xlu0 %1163, %v1156
        %v1165 = vpop.permute.xlu0 %1164
        %v1167 = vsub.f32 %v1137, %v1165
        %v1168 = vsub.f32 %v1139, %v1165
        %v1169 = vmul.f32 %v1167, 1.442695
        %v1170 = vpow.pop %v1169
        %v1171 = vmul.f32 %v1168, 1.442695
        %v1172 = vpow.pop %v1171
        %v1173 = vadd.f32 %v1170, %v1172
        %1174 = vadd.xlane.f32.xlu0 %v1173
        %v1175 = vpop.xlane.xlu0 %1174
        %v1176 = vadd.f32 %v1161, %v1175
        %vm1177 = vcmask 7168
        %1178 = vst.msk [vmem:[#allocation4] sm:$0xff] %vm1177, %v1176
        %1179 = vst.msk [vmem:[#allocation3] sm:$0xff] %vm1177, %v1156
        %v1180 = vld [vmem:[%s340] sm:$0x1]
        %1181 = vxpose.xlu0.b32.start [1/16] %v1180, 128
        %1182 = vxpose.xlu0.b32.cont [2/16] 0, 128
        %1183 = vxpose.xlu0.b32.cont [3/16] 0, 128
        %1184 = vxpose.xlu0.b32.cont [4/16] 0, 128
        %1185 = vxpose.xlu0.b32.cont [5/16] 0, 128
        %1186 = vxpose.xlu0.b32.cont [6/16] 0, 128
        %1187 = vxpose.xlu0.b32.cont [7/16] 0, 128
        %1188 = vxpose.xlu0.b32.cont [8/16] 0, 128
        %1189 = vxpose.xlu0.b32.cont [9/16] 0, 128
        %1190 = vxpose.xlu0.b32.cont [10/16] 0, 128
        %1191 = vxpose.xlu0.b32.cont [11/16] 0, 128
        %1192 = vxpose.xlu0.b32.cont [12/16] 0, 128
        %1193 = vxpose.xlu0.b32.cont [13/16] 0, 128
        %1194 = vxpose.xlu0.b32.cont [14/16] 0, 128
        %1195 = vxpose.xlu0.b32.cont [15/16] 0, 128
        %1196 = vxpose.xlu0.b32.end [16/16] 0, 128
        %v1197 = vpop.trf.xlu0
        %v1198 = vpop.trf.xlu0
        %v1199 = vpop.trf.xlu0
        %v1200 = vpop.trf.xlu0
        %v1201 = vpop.trf.xlu0
        %v1202 = vpop.trf.xlu0
        %v1203 = vpop.trf.xlu0
        %v1204 = vpop.trf.xlu0
        %v1205 = vpop.trf.xlu0
        %v1206 = vpop.trf.xlu0
        %v1207 = vpop.trf.xlu0
        %v1208 = vpop.trf.xlu0
        %v1209 = vpop.trf.xlu0
        %v1210 = vpop.trf.xlu0
        %v1211 = vpop.trf.xlu0
        %v1212 = vpop.trf.xlu0
        %v1213 = vlaneseq
        %v1214 = vand.u32 %v1213, 127
        %v1215 = vadd.s32 %v1214, 128
        %s1216 = smul.u32 %s27, 256
        %v1217 = vstv %s1216
        %v1218 = vadd.s32 %v1214, %v1217
        %v1219 = vadd.s32 %v1215, %v1217
        %v1220 = vld [vmem:[#allocation5] sm:$0xff]
        %1221 = vset.pattern.permute.xlu0 0
        %1222 = vperm.xlu0 %1221, %v1197
        %v1223 = vpop.permute.xlu0 %1222
        %vm1224 = vcmp.eq.s32.totalorder %v1218, %v1223
        %vm1225 = vcmp.eq.s32.totalorder %v1219, %v1223
        %v1226 = vsel %vm1224, %v1137, 0.0
        %v1227 = vsel %vm1225, %v1139, 0.0
        %v1228 = vadd.f32 %v1226, %v1227
        %1229 = vadd.xlane.f32.xlu0 %v1228
        %v1230 = vpop.xlane.xlu0 %1229
        %v1231 = vadd.f32 %v1220, %v1230
        %1232 = vst.msk [vmem:[#allocation5] sm:$0xff] %vm1177, %v1231
        // Predicated region
        $region49: #{texthead_forward.1} parent=43 // pred_check
          %p1233 = pneg %p352
        $region50: #{texthead_forward.1} parent=43 // pred_check_branch
          %1235 = sbr.rel (%p1233) target = $region52
        $region51: #{texthead_forward.1} parent=43 // pred_region
          %v1236 = vld [vmem:[#allocation4] sm:$0xff]
          %v1237 = vlog2.pop %v1236
          %v1238 = vmul.f32 %v1237, 0.6931472
          %v1239 = vld [vmem:[#allocation3] sm:$0xff]
          %v1240 = vadd.f32 %v1238, %v1239
          %v1241 = vld [vmem:[#allocation5] sm:$0xff]
          %v1242 = vsub.f32 %v1240, %v1241
          %1243 = vxpose.xlu0.b32.start [1/16] %v1242, 128
          %1244 = vxpose.xlu0.b32.cont [2/16] 0.0, 128
          %1245 = vxpose.xlu0.b32.cont [3/16] 0.0, 128
          %1246 = vxpose.xlu0.b32.cont [4/16] 0.0, 128
          %1247 = vxpose.xlu0.b32.cont [5/16] 0.0, 128
          %1248 = vxpose.xlu0.b32.cont [6/16] 0.0, 128
          %1249 = vxpose.xlu0.b32.cont [7/16] 0.0, 128
          %1250 = vxpose.xlu0.b32.cont [8/16] 0.0, 128
          %1251 = vxpose.xlu0.b32.cont [9/16] 0.0, 128
          %1252 = vxpose.xlu0.b32.cont [10/16] 0.0, 128
          %1253 = vxpose.xlu0.b32.cont [11/16] 0.0, 128
          %1254 = vxpose.xlu0.b32.cont [12/16] 0.0, 128
          %1255 = vxpose.xlu0.b32.cont [13/16] 0.0, 128
          %1256 = vxpose.xlu0.b32.cont [14/16] 0.0, 128
          %1257 = vxpose.xlu0.b32.cont [15/16] 0.0, 128
          %1258 = vxpose.xlu0.b32.end [16/16] 0.0, 128
          %v1259 = vpop.trf.xlu0
          %v1260 = vpop.trf.xlu0
          %v1261 = vpop.trf.xlu0
          %v1262 = vpop.trf.xlu0
          %v1263 = vpop.trf.xlu0
          %v1264 = vpop.trf.xlu0
          %v1265 = vpop.trf.xlu0
          %v1266 = vpop.trf.xlu0
          %v1267 = vpop.trf.xlu0
          %v1268 = vpop.trf.xlu0
          %v1269 = vpop.trf.xlu0
          %v1270 = vpop.trf.xlu0
          %v1271 = vpop.trf.xlu0
          %v1272 = vpop.trf.xlu0
          %v1273 = vpop.trf.xlu0
          %v1274 = vpop.trf.xlu0
          %vm1275 = vcmask 57344
          %1276 = vst.msk [vmem:[%s350] sm:$0x1] %vm1275, %v1259
        $region52: #{texthead_forward.1} parent=43 // pred_fallthru
          _
        %s1277 = sand.u32 %s190, 1
        %s1278 = scalar_lea.sflag [#allocation7], %s1277
        %s1279 = sand.u32 %s190, 1
        %s1280 = smul.addr %s1279, 8
        %s1281 = scalar_lea.vmem [#allocation6], %s1280
        %p1282 = scmp.lt.s32.totalorder %s26, 1
        %s1283 = scalar_select %p1282, %s26, 1
        %s1284 = scalar_lea.vmem %s7, %s1283
        // Predicated region
        $region53: #{texthead_forward.1} parent=43 // pred_check
          %p1285 = pneg %p200
        $region54: #{texthead_forward.1} parent=43 // pred_check_branch
          %1287 = sbr.rel (%p1285) target = $region56
        $region55: #{texthead_forward.1} parent=43 // pred_region
          %s1288 = smul.u32 2, %s27
          %s1290 = ssub.s32 128, 128
          %1291 = vsyncadd %s1278, %s1290
          %s1292 = smul.addr %s26, 2
          %s1293 = sadd.s32 %s1288, %s1292
          %s1294 = smul.addr %s1293, 64
          %s1295 = scalar_lea.hbm %s6, %s1294
          %s1297 = sshll.u32 %s1281, 4
          %s1298 = int_to_ptr.vmem [resolvable:$true] %s1297
          %1300 = dma.vmem_to_hbm [thread:$0]  %s1298, 128, %s1295, %s1278
        $region56: #{texthead_forward.1} parent=43 // pred_fallthru
          _
        // Predicated region
        $region57: #{texthead_forward.1} parent=43 // pred_check
          %p1301 = pneg %p226
        $region58: #{texthead_forward.1} parent=43 // pred_check_branch
          %1303 = sbr.rel (%p1301) target = $region60
        $region59: #{texthead_forward.1} parent=43 // pred_region
          _
        $region60: #{texthead_forward.1} parent=43 // pred_fallthru
          _
      $region44: #{texthead_forward.1} parent=5 // pred_fallthru
        _
      %p1304 = scmp.le.s32.totalorder 2, %s17
      // Predicated region
      $region61: #{texthead_forward.1} parent=5 // pred_check
        %p1305 = pneg %p1304
      $region62: #{texthead_forward.1} parent=5 // pred_check_branch
        %1307 = sbr.rel (%p1305) target = $region64
      $region63: #{texthead_forward.1} parent=5 // pred_region
        %s1308 = ssub.s32 %s17, 2
        // Predicated region
        $region65: #{texthead_forward.1} parent=63 // pred_check
          %p1309 = pneg %p206
        $region66: #{texthead_forward.1} parent=63 // pred_check_branch
          %1311 = sbr.rel (%p1309) target = $region68
        $region67: #{texthead_forward.1} parent=63 // pred_region
          %s1312 = sand.u32 %s191, 1
          %s1313 = scalar_lea.sflag [#allocation7], %s1312
          %s1314 = sand.u32 %s191, 1
          %s1315 = smul.addr %s1314, 8
          %s1316 = scalar_lea.vmem [#allocation6], %s1315
          %1317 = dma.done %s1313, 128
        $region68: #{texthead_forward.1} parent=63 // pred_fallthru
          _
        // Predicated region
        $region69: #{texthead_forward.1} parent=63 // pred_check
          %p1318 = pneg %p232
        $region70: #{texthead_forward.1} parent=63 // pred_check_branch
          %1320 = sbr.rel (%p1318) target = $region72
        $region71: #{texthead_forward.1} parent=63 // pred_region
          %p1321 = scmp.lt.s32.totalorder %s28, 1
          %s1322 = scalar_select %p1321, %s28, 1
          %s1323 = scalar_lea.vmem %s7, %s1322
        $region72: #{texthead_forward.1} parent=63 // pred_fallthru
          _
      $region64: #{texthead_forward.1} parent=5 // pred_fallthru
        _
    $region6: #{texthead_forward.1} parent=1 // loop_footer
      %s21 = sadd.s32 1, %s17
    $region7: #{texthead_forward.1} parent=1 // loop_footer_branch
      %16 = sbr.rel target = $region3
    $region8: #{texthead_forward.1} parent=1 // loop_exit
      _
    %1324 = vsyncpa [#allocation7], 1
    %s1325 = scalar_lea.sflag [#allocation7], 1
    %1326 = vsyncpa %s1325, 1

</llo_original>
